<compile_context>
chip_gen: v7x
topology: tpu7x:2x2x1
jax: 0.10.0
libtpu: 0.0.40
codegen_flags: <defaults>
</compile_context>

<pallas_src>
import jax
import jax.numpy as jnp
from jax.experimental import pallas as pl
from jax.experimental.pallas import tpu as pltpu

_NEG_INF = float("-inf")
# Scoped-VMEM limit requested from Mosaic: above v5e's 16 MiB default, equal to
# the v6e/v7x default, and below v7x's 64 MiB physical per-TC capacity.
_VMEM_LIMIT_BYTES = 32 * 1024 * 1024


def _vmem_budget_bytes():
    """Conservative per-stage VMEM budget (double-buffered tiles + temporaries)."""
    phys = 64 * 1024 * 1024  # assume the smallest per-TC physical VMEM (v7x)
    try:
        info = pltpu.get_tpu_info()
        phys = int(getattr(info, "vmem_capacity_bytes", phys))
    except Exception:
        pass
    # Stay under every generation's scoped default (16 MiB v5e, 32 MiB v6e/v7x).
    return min(phys // 4, 16 * 1024 * 1024)


def _tile_footprint_bytes(tn, M, H, x_item, out_item):
    x_in = 2 * M * tn * H * x_item        # double-buffered x tile
    o_out = 2 * tn * H * out_item         # double-buffered output tile
    f32_tmp = 2 * tn * H * 4              # f32 accumulator + one promoted x slice
    small = 4 * tn * (M + 2) + 64 * 1024  # per-row weights + slack
    return x_in + o_out + f32_tmp + small


def _pick_block_n(N, M, H, x_item, out_item, budget):
    """Largest N-tile (multiple of 8) whose footprint fits the VMEM budget.

    Returns (block_n, n_pad).  n_pad > 0 means the caller pads N up to a
    multiple of block_n and the stats kernel masks the padded tail rows."""
    candidates = (8192, 4096, 2048, 1024, 512, 256, 128, 64, 32, 16, 8)

    def fits(tn):
        return _tile_footprint_bytes(tn, M, H, x_item, out_item) <= budget

    div = next((tn for tn in candidates if tn <= N and N % tn == 0 and fits(tn)), None)
    pad = next((tn for tn in candidates if fits(tn)), 8)
    pad = min(pad, ((N + 7) // 8) * 8)          # never bigger than padded-N
    if div is not None and (div >= 256 or div >= pad):
        return div, 0                            # exact divisor, no padding
    return pad, (-N) % pad                       # ragged N: pad + mask


# ----------------------------------------------------------------------------
# Fused fast path: x fits VMEM -> one kernel, x read once from HBM.
# ----------------------------------------------------------------------------
def _attention_fusion_fused(x, w_row, b_s, out_dtype):
    M, N, H = x.shape

    def fused_kernel(x_ref, w_ref, b_ref, o_ref):
        w_vec = w_ref[...]                                   # (1, H) f32
        bias = b_ref[0, 0]
        s = []
        for m in range(M):                                   # M tiny -> unrolled
            xs = x_ref[m].astype(jnp.float32)                # no-op for f32 x
            lg = jnp.sum(xs * w_vec, axis=-1, keepdims=True) + bias   # (N, 1)
            mx = jnp.max(lg, axis=0, keepdims=True)
            e = jnp.exp(lg - mx)
            s.append(e / jnp.sum(e, axis=0, keepdims=True))  # softmax over N (exact)
        s_sum = s[0]
        for m in range(1, M):
            s_sum = s_sum + s[m]
        inv_sum = 1.0 / s_sum                                # exact cross-model renorm
        acc = (s[0] * inv_sum) * x_ref[0].astype(jnp.float32)
        for m in range(1, M):
            acc = acc + (s[m] * inv_sum) * x_ref[m].astype(jnp.float32)
        o_ref[...] = acc.astype(o_ref.dtype)

    return pl.pallas_call(
        fused_kernel,
        out_shape=jax.ShapeDtypeStruct((N, H), out_dtype),
        in_specs=[
            pl.BlockSpec(memory_space=pltpu.MemorySpace.VMEM),   # x (whole array)
            pl.BlockSpec(memory_space=pltpu.MemorySpace.VMEM),   # w (1, H)
            pl.BlockSpec(memory_space=pltpu.MemorySpace.SMEM),   # bias scalar
        ],
        out_specs=pl.BlockSpec(memory_space=pltpu.MemorySpace.VMEM),
        compiler_params=pltpu.CompilerParams(vmem_limit_bytes=_VMEM_LIMIT_BYTES),
    )(x, w_row, b_s)


# ----------------------------------------------------------------------------
# Streaming path: Stage 1 (online-softmax stats) + Stage 2 (weights-on-the-fly
# fusion).  x is read twice from HBM, the minimum given the softmax over N.
# ----------------------------------------------------------------------------
def _attention_fusion_tiled(x, w_row, b_s, out_dtype, block_n, n_pad):
    M, N0, H = x.shape
    if n_pad:
        # One extra copy of x only in the ragged-N case; padded rows are zeros
        # and are masked out of the softmax statistics below.
        x = jnp.pad(x, ((0, 0), (0, n_pad), (0, 0)))
    N = N0 + n_pad
    n_tiles = N // block_n

    # ---- Stage 1: per-model running (max, sum_exp) over N, tiled ------------
    # Output [2, M] is a resident accumulator (constant block index); the grid
    # axis is a sequential reduction -> "arbitrary".
    def stats_kernel(x_ref, w_ref, b_ref, st_ref):
        i = pl.program_id(0)

        @pl.when(i == 0)
        def _init():
            st_ref[0:1, :] = jnp.full((1, M), _NEG_INF, jnp.float32)  # running max
            st_ref[1:2, :] = jnp.zeros((1, M), jnp.float32)           # running sum_exp

        w_vec = w_ref[...]                                   # (1, H) f32
        bias = b_ref[0, 0]
        if n_pad:
            rows = jax.lax.broadcasted_iota(jnp.int32, (block_n, 1), 0)
            valid = (rows + i * block_n) < N0                # mask padded tail rows
        for m in range(M):                                   # M tiny -> unrolled
            xs = x_ref[m].astype(jnp.float32)                # keep f32 weight precision
            lg = jnp.sum(xs * w_vec, axis=-1, keepdims=True) + bias   # (tn, 1) VPU/XLU
            if n_pad:
                lg = jnp.where(valid, lg, _NEG_INF)          # padded rows -> exp() = 0
            m_old = st_ref[0:1, m:m + 1]
            l_old = st_ref[1:2, m:m + 1]
            m_new = jnp.maximum(m_old, jnp.max(lg, axis=0, keepdims=True))
            p_sum = jnp.sum(jnp.exp(lg - m_new), axis=0, keepdims=True)
            st_ref[0:1, m:m + 1] = m_new
            st_ref[1:2, m:m + 1] = l_old * jnp.exp(m_old - m_new) + p_sum

    stats = pl.pallas_call(
        stats_kernel,
        out_shape=jax.ShapeDtypeStruct((2, M), jnp.float32),
        grid=(n_tiles,),
        in_specs=[
            pl.BlockSpec((M, block_n, H), lambda i: (0, i, 0)),
            pl.BlockSpec((1, H), lambda i: (0, 0)),              # resident weight row
            pl.BlockSpec(memory_space=pltpu.MemorySpace.SMEM),   # bias scalar
        ],
        out_specs=pl.BlockSpec((2, M), lambda i: (0, 0)),        # resident accumulator
        compiler_params=pltpu.CompilerParams(
            dimension_semantics=("arbitrary",),                  # sequential reduction
            vmem_limit_bytes=_VMEM_LIMIT_BYTES),
    )(x, w_row, b_s)

    # ---- Stage 2: recompute logits on the resident tile, weights on the fly -
    # Per-row independent -> "parallel" (v7x megacore shards the N axis).
    # NOTE: with H=32 the (tn, 32) output store uses 32/128 lanes (masked vst);
    # see the lane-packing TODO at the top of the file.
    def fusion_kernel(x_ref, w_ref, b_ref, st_ref, o_ref):
        w_vec = w_ref[...]
        bias = b_ref[0, 0]
        s = []
        for m in range(M):
            xs = x_ref[m].astype(jnp.float32)
            lg = jnp.sum(xs * w_vec, axis=-1, keepdims=True) + bias   # (tn, 1)
            inv_d = 1.0 / st_ref[1:2, m:m + 1]                        # exact recip (tiny)
            s.append(jnp.exp(lg - st_ref[0:1, m:m + 1]) * inv_d)      # softmax_m values
        s_sum = s[0]
        for m in range(1, M):
            s_sum = s_sum + s[m]
        inv_sum = 1.0 / s_sum                                         # exact renorm
        acc = (s[0] * inv_sum) * x_ref[0].astype(jnp.float32)
        for m in range(1, M):
            acc = acc + (s[m] * inv_sum) * x_ref[m].astype(jnp.float32)
        o_ref[...] = acc.astype(o_ref.dtype)

    out = pl.pallas_call(
        fusion_kernel,
        out_shape=jax.ShapeDtypeStruct((N, H), out_dtype),
        grid=(n_tiles,),
        in_specs=[
            pl.BlockSpec((M, block_n, H), lambda i: (0, i, 0)),
            pl.BlockSpec((1, H), lambda i: (0, 0)),
            pl.BlockSpec(memory_space=pltpu.MemorySpace.SMEM),
            pl.BlockSpec((2, M), lambda i: (0, 0)),              # resident stats
        ],
        out_specs=pl.BlockSpec((block_n, H), lambda i: (i, 0)),
        compiler_params=pltpu.CompilerParams(
            dimension_semantics=("parallel",),
            vmem_limit_bytes=_VMEM_LIMIT_BYTES),
    )(x, w_row, b_s, stats)

    return out[:N0] if n_pad else out


def attention_fusion(x, w, b, *, block_n=None, use_fused=None):
    """x: [M, N, H] stacked model outputs; w: [1, H] Linear weight; b: bias.
    Returns the fused output [N, H] (same dtype as x)."""
    M, N, H = x.shape
    out_dtype = x.dtype
    x_item = jnp.dtype(x.dtype).itemsize
    w_row = jnp.reshape(w, (1, H)).astype(jnp.float32)
    b_s = jnp.reshape(b, (1, 1)).astype(jnp.float32)
    budget = _vmem_budget_bytes()

    if use_fused is None:
        fused_bytes = (M * N * H * x_item + N * H * x_item        # x + out resident
                       + N * H * 4 + 4 * N * (M + 2) + 64 * 1024)  # f32 temporaries
        use_fused = fused_bytes <= (2 * budget) // 3
    if use_fused:
        return _attention_fusion_fused(x, w_row, b_s, out_dtype)

    if block_n is None:
        block_n, n_pad = _pick_block_n(N, M, H, x_item, x_item, budget)
    else:
        block_n = int(block_n)
        if block_n >= N:
            block_n, n_pad = N, 0                      # full-axis block (any N)
        else:
            block_n = max(8, (block_n // 8) * 8)       # (8, 128) tiling rule
            n_pad = (-N) % block_n
    return _attention_fusion_tiled(x, w_row, b_s, out_dtype, block_n, n_pad)


def attention_fusion_ref(x, w, b):
    """Pure-JAX reference mirroring the PyTorch module (exact f32 elementwise math)."""
    logits = jnp.sum(x * jnp.reshape(w, (1, 1, -1)), axis=-1) + jnp.reshape(b, ())  # [M, N]
    scores = jax.nn.softmax(logits, axis=1)                       # softmax over N
    weights = scores / jnp.sum(scores, axis=0, keepdims=True)     # renorm over models
    return jnp.sum(weights[:, :, None] * x, axis=0)


if __name__ == "__main__":
    M, N, H = 3, 256, 32  # num model outputs, seq length, hidden_dim

    key = jax.random.PRNGKey(0)
    kx, kw, kb = jax.random.split(key, 3)

    # Stacked "outputs" (list of M tensors [N, H] in the PyTorch module).
    x = jax.random.normal(kx, (M, N, H), dtype=jnp.float32)

    # Deterministic Linear(hidden_dim, 1) parameters (uniform init like PyTorch).
    bound = 1.0 / (H ** 0.5)
    w = jax.random.uniform(kw, (1, H), jnp.float32, -bound, bound)
    b = jax.random.uniform(kb, (1, 1), jnp.float32, -bound, bound)

    ref = attention_fusion_ref(x, w, b)

    # 1) Auto dispatch: x fits VMEM -> single fused kernel (1 launch, x read once).
    out = jax.block_until_ready(attention_fusion(x, w, b))
    assert out.shape == (N, H)
    assert jnp.allclose(out, ref, atol=1e-4, rtol=1e-4), "fused path mismatch"

    # 2) Forced streaming path: online-softmax stats kernel + fusion kernel,
    #    4 pipelined grid steps over N.
    out_t = jax.block_until_ready(
        attention_fusion(x, w, b, use_fused=False, block_n=64))
    assert jnp.allclose(out_t, ref, atol=1e-4, rtol=1e-4), "tiled path mismatch"

    # 3) Ragged N on the streaming path (tail padding + in-kernel masking).
    N2 = 200
    x2 = x[:, :N2, :]
    ref2 = attention_fusion_ref(x2, w, b)
    out2 = jax.block_until_ready(
        attention_fusion(x2, w, b, use_fused=False, block_n=64))
    assert out2.shape == (N2, H)
    assert jnp.allclose(out2, ref2, atol=1e-4, rtol=1e-4), "ragged-N path mismatch"

    print("KERNEL_OK")
</pallas_src>

<mosaic_0001>
module attributes {stable_mosaic.version = 11 : i64} {
  func.func @fused_kernel(%arg0: memref<3x256x32xf32, #tpu.memory_space<vmem>>, %arg1: memref<1x32xf32, #tpu.memory_space<vmem>>, %arg2: memref<1x1xf32, #tpu.memory_space<smem>>, %arg3: memref<256x32xf32, #tpu.memory_space<vmem>>) attributes {dimension_semantics = [], scalar_prefetch = 0 : i64, scratch_operands = 0 : i64, tpu.core_type = #tpu.core_type<tc>} {
    %c0 = arith.constant 0 : index
    %c0_0 = arith.constant 0 : index
    %0 = vector.load %arg1[%c0, %c0_0] : memref<1x32xf32, #tpu.memory_space<vmem>>, vector<1x32xf32>
    %c0_1 = arith.constant 0 : index
    %c0_2 = arith.constant 0 : index
    %1 = memref.load %arg2[%c0_1, %c0_2] : memref<1x1xf32, #tpu.memory_space<smem>>
    %c0_3 = arith.constant 0 : index
    %c0_4 = arith.constant 0 : index
    %c0_5 = arith.constant 0 : index
    %2 = vector.load %arg0[%c0_3, %c0_4, %c0_5] : memref<3x256x32xf32, #tpu.memory_space<vmem>>, vector<1x256x32xf32>
    %3 = vector.shape_cast %2 : vector<1x256x32xf32> to vector<256x32xf32>
    %4 = vector.broadcast %0 : vector<1x32xf32> to vector<256x32xf32>
    %5 = arith.mulf %3, %4 : vector<256x32xf32>
    %cst = arith.constant dense<0.000000e+00> : vector<256xf32>
    %6 = vector.multi_reduction <add>, %5, %cst [1] : vector<256x32xf32> to vector<256xf32>
    %7 = vector.shape_cast %6 : vector<256xf32> to vector<256x1xf32>
    %8 = vector.broadcast %1 : f32 to vector<256x1xf32>
    %9 = arith.addf %7, %8 : vector<256x1xf32>
    %cst_6 = arith.constant dense<0xFF800000> : vector<1xf32>
    %10 = vector.multi_reduction <maximumf>, %9, %cst_6 [0] : vector<256x1xf32> to vector<1xf32>
    %11 = vector.shape_cast %10 : vector<1xf32> to vector<1x1xf32>
    %12 = vector.broadcast %11 : vector<1x1xf32> to vector<256x1xf32>
    %13 = arith.subf %9, %12 : vector<256x1xf32>
    %14 = math.exp %13 : vector<256x1xf32>
    %cst_7 = arith.constant dense<0.000000e+00> : vector<1xf32>
    %15 = vector.multi_reduction <add>, %14, %cst_7 [0] : vector<256x1xf32> to vector<1xf32>
    %16 = vector.shape_cast %15 : vector<1xf32> to vector<1x1xf32>
    %17 = vector.broadcast %16 : vector<1x1xf32> to vector<256x1xf32>
    %18 = arith.divf %14, %17 : vector<256x1xf32>
    %c1 = arith.constant 1 : index
    %c0_8 = arith.constant 0 : index
    %c0_9 = arith.constant 0 : index
    %19 = vector.load %arg0[%c1, %c0_8, %c0_9] : memref<3x256x32xf32, #tpu.memory_space<vmem>>, vector<1x256x32xf32>
    %20 = vector.shape_cast %19 : vector<1x256x32xf32> to vector<256x32xf32>
    %21 = vector.broadcast %0 : vector<1x32xf32> to vector<256x32xf32>
    %22 = arith.mulf %20, %21 : vector<256x32xf32>
    %cst_10 = arith.constant dense<0.000000e+00> : vector<256xf32>
    %23 = vector.multi_reduction <add>, %22, %cst_10 [1] : vector<256x32xf32> to vector<256xf32>
    %24 = vector.shape_cast %23 : vector<256xf32> to vector<256x1xf32>
    %25 = vector.broadcast %1 : f32 to vector<256x1xf32>
    %26 = arith.addf %24, %25 : vector<256x1xf32>
    %cst_11 = arith.constant dense<0xFF800000> : vector<1xf32>
    %27 = vector.multi_reduction <maximumf>, %26, %cst_11 [0] : vector<256x1xf32> to vector<1xf32>
    %28 = vector.shape_cast %27 : vector<1xf32> to vector<1x1xf32>
    %29 = vector.broadcast %28 : vector<1x1xf32> to vector<256x1xf32>
    %30 = arith.subf %26, %29 : vector<256x1xf32>
    %31 = math.exp %30 : vector<256x1xf32>
    %cst_12 = arith.constant dense<0.000000e+00> : vector<1xf32>
    %32 = vector.multi_reduction <add>, %31, %cst_12 [0] : vector<256x1xf32> to vector<1xf32>
    %33 = vector.shape_cast %32 : vector<1xf32> to vector<1x1xf32>
    %34 = vector.broadcast %33 : vector<1x1xf32> to vector<256x1xf32>
    %35 = arith.divf %31, %34 : vector<256x1xf32>
    %c2 = arith.constant 2 : index
    %c0_13 = arith.constant 0 : index
    %c0_14 = arith.constant 0 : index
    %36 = vector.load %arg0[%c2, %c0_13, %c0_14] : memref<3x256x32xf32, #tpu.memory_space<vmem>>, vector<1x256x32xf32>
    %37 = vector.shape_cast %36 : vector<1x256x32xf32> to vector<256x32xf32>
    %38 = vector.broadcast %0 : vector<1x32xf32> to vector<256x32xf32>
    %39 = arith.mulf %37, %38 : vector<256x32xf32>
    %cst_15 = arith.constant dense<0.000000e+00> : vector<256xf32>
    %40 = vector.multi_reduction <add>, %39, %cst_15 [1] : vector<256x32xf32> to vector<256xf32>
    %41 = vector.shape_cast %40 : vector<256xf32> to vector<256x1xf32>
    %42 = vector.broadcast %1 : f32 to vector<256x1xf32>
    %43 = arith.addf %41, %42 : vector<256x1xf32>
    %cst_16 = arith.constant dense<0xFF800000> : vector<1xf32>
    %44 = vector.multi_reduction <maximumf>, %43, %cst_16 [0] : vector<256x1xf32> to vector<1xf32>
    %45 = vector.shape_cast %44 : vector<1xf32> to vector<1x1xf32>
    %46 = vector.broadcast %45 : vector<1x1xf32> to vector<256x1xf32>
    %47 = arith.subf %43, %46 : vector<256x1xf32>
    %48 = math.exp %47 : vector<256x1xf32>
    %cst_17 = arith.constant dense<0.000000e+00> : vector<1xf32>
    %49 = vector.multi_reduction <add>, %48, %cst_17 [0] : vector<256x1xf32> to vector<1xf32>
    %50 = vector.shape_cast %49 : vector<1xf32> to vector<1x1xf32>
    %51 = vector.broadcast %50 : vector<1x1xf32> to vector<256x1xf32>
    %52 = arith.divf %48, %51 : vector<256x1xf32>
    %53 = arith.addf %18, %35 : vector<256x1xf32>
    %54 = arith.addf %53, %52 : vector<256x1xf32>
    %cst_18 = arith.constant 1.000000e+00 : f32
    %55 = vector.broadcast %cst_18 : f32 to vector<256x1xf32>
    %56 = arith.divf %55, %54 : vector<256x1xf32>
    %57 = arith.mulf %18, %56 : vector<256x1xf32>
    %c0_19 = arith.constant 0 : index
    %c0_20 = arith.constant 0 : index
    %c0_21 = arith.constant 0 : index
    %58 = vector.load %arg0[%c0_19, %c0_20, %c0_21] : memref<3x256x32xf32, #tpu.memory_space<vmem>>, vector<1x256x32xf32>
    %59 = vector.shape_cast %58 : vector<1x256x32xf32> to vector<256x32xf32>
    %60 = vector.broadcast %57 : vector<256x1xf32> to vector<256x32xf32>
    %61 = arith.mulf %60, %59 : vector<256x32xf32>
    %62 = arith.mulf %35, %56 : vector<256x1xf32>
    %c1_22 = arith.constant 1 : index
    %c0_23 = arith.constant 0 : index
    %c0_24 = arith.constant 0 : index
    %63 = vector.load %arg0[%c1_22, %c0_23, %c0_24] : memref<3x256x32xf32, #tpu.memory_space<vmem>>, vector<1x256x32xf32>
    %64 = vector.shape_cast %63 : vector<1x256x32xf32> to vector<256x32xf32>
    %65 = vector.broadcast %62 : vector<256x1xf32> to vector<256x32xf32>
    %66 = arith.mulf %65, %64 : vector<256x32xf32>
    %67 = arith.addf %61, %66 : vector<256x32xf32>
    %68 = arith.mulf %52, %56 : vector<256x1xf32>
    %c2_25 = arith.constant 2 : index
    %c0_26 = arith.constant 0 : index
    %c0_27 = arith.constant 0 : index
    %69 = vector.load %arg0[%c2_25, %c0_26, %c0_27] : memref<3x256x32xf32, #tpu.memory_space<vmem>>, vector<1x256x32xf32>
    %70 = vector.shape_cast %69 : vector<1x256x32xf32> to vector<256x32xf32>
    %71 = vector.broadcast %68 : vector<256x1xf32> to vector<256x32xf32>
    %72 = arith.mulf %71, %70 : vector<256x32xf32>
    %73 = arith.addf %67, %72 : vector<256x32xf32>
    %c0_28 = arith.constant 0 : index
    %c0_29 = arith.constant 0 : index
    %74 = vector.load %arg3[%c0_28, %c0_29] : memref<256x32xf32, #tpu.memory_space<vmem>>, vector<256x32xf32>
    tpu.vector_store %arg3[%c0_28, %c0_29], %73 {strides = array<i32>} : memref<256x32xf32, #tpu.memory_space<vmem>>, vector<256x32xf32>,
    return
  }
}

</mosaic_0001>

<llo_original>
// kernel: tpu_custom_call.1
$region0: #{tpu_custom_call.1}
  #allocation0 [shape = 'u32[]', space=smem, size = 0x4, offset = 0x4, fixed_abs, tag = 'smem constant byte address 0x4 - core index']
  #allocation1 [shape = 'u32[144,128]{1,0:T(1,128)}', space=vmem, size = 0x12000, scoped, tag = 'internal scratch']
  #allocation2 [shape = 'f32[1,1]{1,0:T(1,128)S(6)}', space=smem, size = 0x200, scoped, tag = 'scoped memory for tpu_custom_call.1']
  %s0 = inlined_call_operand.vmem [shape: f32[3,256,32], index: 0, kind: input, shape index: {}]
  %s1 = inlined_call_operand.vmem [shape: f32[1,32], index: 1, kind: input, shape index: {}]
  %s2 = inlined_call_operand.<no memory space> [shape: f32[1,1], index: 2, kind: input, shape index: {}]
  %s3 = inlined_call_operand.vmem [shape: f32[256,32], index: 3, kind: output, shape index: {}]
  %s4 = sld [smem:[#allocation0]]
  $region22: #{tpu_custom_call.1} parent=0
    _
  %s6 = ssub.s32 1, %s4
  %s7 = scalar_select 0, %s6, %s4
  %8 = sst [smem:[#allocation2]] %s2
  // Predicated region
  $region2: #{tpu_custom_call.1} parent=0 // pred_check
    _
  $region3: #{tpu_custom_call.1} parent=0 // pred_check_branch
    %10 = sbr.rel (0) target = $region5
  $region4: #{tpu_custom_call.1} parent=0 // pred_region
    _
  $region5: #{tpu_custom_call.1} parent=0 // pred_fallthru
    _
  // Predicated region
  $region6: #{tpu_custom_call.1} parent=0 // pred_check
    _
  $region7: #{tpu_custom_call.1} parent=0 // pred_check_branch
    %12 = sbr.rel (0) target = $region9
  $region8: #{tpu_custom_call.1} parent=0 // pred_region
    _
  $region9: #{tpu_custom_call.1} parent=0 // pred_fallthru
    _
  // Predicated region
  $region10: #{tpu_custom_call.1} parent=0 // pred_check
    _
  $region11: #{tpu_custom_call.1} parent=0 // pred_check_branch
    %14 = sbr.rel (0) target = $region13
  $region12: #{tpu_custom_call.1} parent=0 // pred_region
    _
  $region13: #{tpu_custom_call.1} parent=0 // pred_fallthru
    _
  %v15 = vld [vmem:[%s1] sm:$0x1]
  %s16 = sld [smem:[#allocation2]]
  %v17 = vld [vmem:[%s0] sm:$0xff]
  %v18 = vld [vmem:[%s0 + $0x8] sm:$0xff]
  %v19 = vld [vmem:[%s0 + $0x10] sm:$0xff]
  %v20 = vld [vmem:[%s0 + $0x18] sm:$0xff]
  %v21 = vld [vmem:[%s0 + $0x20] sm:$0xff]
  %v22 = vld [vmem:[%s0 + $0x28] sm:$0xff]
  %v23 = vld [vmem:[%s0 + $0x30] sm:$0xff]
  %v24 = vld [vmem:[%s0 + $0x38] sm:$0xff]
  %v25 = vld [vmem:[%s0 + $0x40] sm:$0xff]
  %v26 = vld [vmem:[%s0 + $0x48] sm:$0xff]
  %v27 = vld [vmem:[%s0 + $0x50] sm:$0xff]
  %v28 = vld [vmem:[%s0 + $0x58] sm:$0xff]
  %v29 = vld [vmem:[%s0 + $0x60] sm:$0xff]
  %v30 = vld [vmem:[%s0 + $0x68] sm:$0xff]
  %v31 = vld [vmem:[%s0 + $0x70] sm:$0xff]
  %v32 = vld [vmem:[%s0 + $0x78] sm:$0xff]
  %v33 = vld [vmem:[%s0 + $0x80] sm:$0xff]
  %v34 = vld [vmem:[%s0 + $0x88] sm:$0xff]
  %v35 = vld [vmem:[%s0 + $0x90] sm:$0xff]
  %v36 = vld [vmem:[%s0 + $0x98] sm:$0xff]
  %v37 = vld [vmem:[%s0 + $0xa0] sm:$0xff]
  %v38 = vld [vmem:[%s0 + $0xa8] sm:$0xff]
  %v39 = vld [vmem:[%s0 + $0xb0] sm:$0xff]
  %v40 = vld [vmem:[%s0 + $0xb8] sm:$0xff]
  %v41 = vld [vmem:[%s0 + $0xc0] sm:$0xff]
  %v42 = vld [vmem:[%s0 + $0xc8] sm:$0xff]
  %v43 = vld [vmem:[%s0 + $0xd0] sm:$0xff]
  %v44 = vld [vmem:[%s0 + $0xd8] sm:$0xff]
  %v45 = vld [vmem:[%s0 + $0xe0] sm:$0xff]
  %v46 = vld [vmem:[%s0 + $0xe8] sm:$0xff]
  %v47 = vld [vmem:[%s0 + $0xf0] sm:$0xff]
  %v48 = vld [vmem:[%s0 + $0xf8] sm:$0xff]
  %v50 = vlaneseq
  %v51 = vshrl.u32 %v50, 7
  %v52 = vsub.s32 0, %v51
  %v53 = vrot.slane %v15, %v52
  %v55 = vmul.f32 %v17, %v53
  %v56 = vmul.f32 %v18, %v53
  %v57 = vmul.f32 %v19, %v53
  %v58 = vmul.f32 %v20, %v53
  %v59 = vmul.f32 %v21, %v53
  %v60 = vmul.f32 %v22, %v53
  %v61 = vmul.f32 %v23, %v53
  %v62 = vmul.f32 %v24, %v53
  %v63 = vmul.f32 %v25, %v53
  %v64 = vmul.f32 %v26, %v53
  %v65 = vmul.f32 %v27, %v53
  %v66 = vmul.f32 %v28, %v53
  %v67 = vmul.f32 %v29, %v53
  %v68 = vmul.f32 %v30, %v53
  %v69 = vmul.f32 %v31, %v53
  %v70 = vmul.f32 %v32, %v53
  %v71 = vmul.f32 %v33, %v53
  %v72 = vmul.f32 %v34, %v53
  %v73 = vmul.f32 %v35, %v53
  %v74 = vmul.f32 %v36, %v53
  %v75 = vmul.f32 %v37, %v53
  %v76 = vmul.f32 %v38, %v53
  %v77 = vmul.f32 %v39, %v53
  %v78 = vmul.f32 %v40, %v53
  %v79 = vmul.f32 %v41, %v53
  %v80 = vmul.f32 %v42, %v53
  %v81 = vmul.f32 %v43, %v53
  %v82 = vmul.f32 %v44, %v53
  %v83 = vmul.f32 %v45, %v53
  %v84 = vmul.f32 %v46, %v53
  %v85 = vmul.f32 %v47, %v53
  %v86 = vmul.f32 %v48, %v53
  %vm87 = vcmask 261120
  %v88 = vsel %vm87, %v55, 0.0
  %89 = vadd.xlane.f32.xlu0 %v88
  %v90 = vpop.xlane.xlu0 %89
  %v91 = vsel %vm87, %v56, 0.0
  %92 = vadd.xlane.f32.xlu0 %v91
  %v93 = vpop.xlane.xlu0 %92
  %v94 = vsel %vm87, %v57, 0.0
  %95 = vadd.xlane.f32.xlu0 %v94
  %v96 = vpop.xlane.xlu0 %95
  %v97 = vsel %vm87, %v58, 0.0
  %98 = vadd.xlane.f32.xlu0 %v97
  %v99 = vpop.xlane.xlu0 %98
  %v100 = vsel %vm87, %v59, 0.0
  %101 = vadd.xlane.f32.xlu0 %v100
  %v102 = vpop.xlane.xlu0 %101
  %v103 = vsel %vm87, %v60, 0.0
  %104 = vadd.xlane.f32.xlu0 %v103
  %v105 = vpop.xlane.xlu0 %104
  %v106 = vsel %vm87, %v61, 0.0
  %107 = vadd.xlane.f32.xlu0 %v106
  %v108 = vpop.xlane.xlu0 %107
  %v109 = vsel %vm87, %v62, 0.0
  %110 = vadd.xlane.f32.xlu0 %v109
  %v111 = vpop.xlane.xlu0 %110
  %v112 = vsel %vm87, %v63, 0.0
  %113 = vadd.xlane.f32.xlu0 %v112
  %v114 = vpop.xlane.xlu0 %113
  %v115 = vsel %vm87, %v64, 0.0
  %116 = vadd.xlane.f32.xlu0 %v115
  %v117 = vpop.xlane.xlu0 %116
  %v118 = vsel %vm87, %v65, 0.0
  %119 = vadd.xlane.f32.xlu0 %v118
  %v120 = vpop.xlane.xlu0 %119
  %v121 = vsel %vm87, %v66, 0.0
  %122 = vadd.xlane.f32.xlu0 %v121
  %v123 = vpop.xlane.xlu0 %122
  %v124 = vsel %vm87, %v67, 0.0
  %125 = vadd.xlane.f32.xlu0 %v124
  %v126 = vpop.xlane.xlu0 %125
  %v127 = vsel %vm87, %v68, 0.0
  %128 = vadd.xlane.f32.xlu0 %v127
  %v129 = vpop.xlane.xlu0 %128
  %v130 = vsel %vm87, %v69, 0.0
  %131 = vadd.xlane.f32.xlu0 %v130
  %v132 = vpop.xlane.xlu0 %131
  %v133 = vsel %vm87, %v70, 0.0
  %134 = vadd.xlane.f32.xlu0 %v133
  %v135 = vpop.xlane.xlu0 %134
  %v136 = vsel %vm87, %v71, 0.0
  %137 = vadd.xlane.f32.xlu0 %v136
  %v138 = vpop.xlane.xlu0 %137
  %v139 = vsel %vm87, %v72, 0.0
  %140 = vadd.xlane.f32.xlu0 %v139
  %v141 = vpop.xlane.xlu0 %140
  %v142 = vsel %vm87, %v73, 0.0
  %143 = vadd.xlane.f32.xlu0 %v142
  %v144 = vpop.xlane.xlu0 %143
  %v145 = vsel %vm87, %v74, 0.0
  %146 = vadd.xlane.f32.xlu0 %v145
  %v147 = vpop.xlane.xlu0 %146
  %v148 = vsel %vm87, %v75, 0.0
  %149 = vadd.xlane.f32.xlu0 %v148
  %v150 = vpop.xlane.xlu0 %149
  %v151 = vsel %vm87, %v76, 0.0
  %152 = vadd.xlane.f32.xlu0 %v151
  %v153 = vpop.xlane.xlu0 %152
  %v154 = vsel %vm87, %v77, 0.0
  %155 = vadd.xlane.f32.xlu0 %v154
  %v156 = vpop.xlane.xlu0 %155
  %v157 = vsel %vm87, %v78, 0.0
  %158 = vadd.xlane.f32.xlu0 %v157
  %v159 = vpop.xlane.xlu0 %158
  %v160 = vsel %vm87, %v79, 0.0
  %161 = vadd.xlane.f32.xlu0 %v160
  %v162 = vpop.xlane.xlu0 %161
  %v163 = vsel %vm87, %v80, 0.0
  %164 = vadd.xlane.f32.xlu0 %v163
  %v165 = vpop.xlane.xlu0 %164
  %v166 = vsel %vm87, %v81, 0.0
  %167 = vadd.xlane.f32.xlu0 %v166
  %v168 = vpop.xlane.xlu0 %167
  %v169 = vsel %vm87, %v82, 0.0
  %170 = vadd.xlane.f32.xlu0 %v169
  %v171 = vpop.xlane.xlu0 %170
  %v172 = vsel %vm87, %v83, 0.0
  %173 = vadd.xlane.f32.xlu0 %v172
  %v174 = vpop.xlane.xlu0 %173
  %v175 = vsel %vm87, %v84, 0.0
  %176 = vadd.xlane.f32.xlu0 %v175
  %v177 = vpop.xlane.xlu0 %176
  %v178 = vsel %vm87, %v85, 0.0
  %179 = vadd.xlane.f32.xlu0 %v178
  %v180 = vpop.xlane.xlu0 %179
  %v181 = vsel %vm87, %v86, 0.0
  %182 = vadd.xlane.f32.xlu0 %v181
  %v183 = vpop.xlane.xlu0 %182
  %v184 = vstv %s16
  %v185 = vadd.f32 %v90, %v184
  %v186 = vadd.f32 %v93, %v184
  %v187 = vadd.f32 %v96, %v184
  %v188 = vadd.f32 %v99, %v184
  %v189 = vadd.f32 %v102, %v184
  %v190 = vadd.f32 %v105, %v184
  %v191 = vadd.f32 %v108, %v184
  %v192 = vadd.f32 %v111, %v184
  %v193 = vadd.f32 %v114, %v184
  %v194 = vadd.f32 %v117, %v184
  %v195 = vadd.f32 %v120, %v184
  %v196 = vadd.f32 %v123, %v184
  %v197 = vadd.f32 %v126, %v184
  %v198 = vadd.f32 %v129, %v184
  %v199 = vadd.f32 %v132, %v184
  %v200 = vadd.f32 %v135, %v184
  %v201 = vadd.f32 %v138, %v184
  %v202 = vadd.f32 %v141, %v184
  %v203 = vadd.f32 %v144, %v184
  %v204 = vadd.f32 %v147, %v184
  %v205 = vadd.f32 %v150, %v184
  %v206 = vadd.f32 %v153, %v184
  %v207 = vadd.f32 %v156, %v184
  %v208 = vadd.f32 %v159, %v184
  %v209 = vadd.f32 %v162, %v184
  %v210 = vadd.f32 %v165, %v184
  %v211 = vadd.f32 %v168, %v184
  %v212 = vadd.f32 %v171, %v184
  %v213 = vadd.f32 %v174, %v184
  %v214 = vadd.f32 %v177, %v184
  %v215 = vadd.f32 %v180, %v184
  %v216 = vadd.f32 %v183, %v184
  %v217 = vmax.f32 %v185, %v189
  %v218 = vmax.f32 %v186, %v190
  %v219 = vmax.f32 %v187, %v191
  %v220 = vmax.f32 %v188, %v192
  %v221 = vmax.f32 %v217, %v193
  %v222 = vmax.f32 %v218, %v194
  %v223 = vmax.f32 %v219, %v195
  %v224 = vmax.f32 %v220, %v196
  %v225 = vmax.f32 %v221, %v197
  %v226 = vmax.f32 %v222, %v198
  %v227 = vmax.f32 %v223, %v199
  %v228 = vmax.f32 %v224, %v200
  %v229 = vmax.f32 %v225, %v201
  %v230 = vmax.f32 %v226, %v202
  %v231 = vmax.f32 %v227, %v203
  %v232 = vmax.f32 %v228, %v204
  %v233 = vmax.f32 %v229, %v205
  %v234 = vmax.f32 %v230, %v206
  %v235 = vmax.f32 %v231, %v207
  %v236 = vmax.f32 %v232, %v208
  %v237 = vmax.f32 %v233, %v209
  %v238 = vmax.f32 %v234, %v210
  %v239 = vmax.f32 %v235, %v211
  %v240 = vmax.f32 %v236, %v212
  %v241 = vmax.f32 %v237, %v213
  %v242 = vmax.f32 %v238, %v214
  %v243 = vmax.f32 %v239, %v215
  %v244 = vmax.f32 %v240, %v216
  %v245 = vmax.f32 %v241, %v242
  %v246 = vmax.f32 %v243, %v244
  %v247 = vmax.f32 %v245, %v246
  %v248 = vrot.slane %v247, 4
  %v249 = vmax.f32 %v247, %v248
  %v250 = vrot.slane %v249, 2
  %v251 = vmax.f32 %v249, %v250
  %v252 = vrot.slane %v251, 1
  %v253 = vmax.f32 %v251, %v252
  %v254 = vsub.f32 %v185, %v253
  %v255 = vsub.f32 %v186, %v253
  %v256 = vsub.f32 %v187, %v253
  %v257 = vsub.f32 %v188, %v253
  %v258 = vsub.f32 %v189, %v253
  %v259 = vsub.f32 %v190, %v253
  %v260 = vsub.f32 %v191, %v253
  %v261 = vsub.f32 %v192, %v253
  %v262 = vsub.f32 %v193, %v253
  %v263 = vsub.f32 %v194, %v253
  %v264 = vsub.f32 %v195, %v253
  %v265 = vsub.f32 %v196, %v253
  %v266 = vsub.f32 %v197, %v253
  %v267 = vsub.f32 %v198, %v253
  %v268 = vsub.f32 %v199, %v253
  %v269 = vsub.f32 %v200, %v253
  %v270 = vsub.f32 %v201, %v253
  %v271 = vsub.f32 %v202, %v253
  %v272 = vsub.f32 %v203, %v253
  %v273 = vsub.f32 %v204, %v253
  %v274 = vsub.f32 %v205, %v253
  %v275 = vsub.f32 %v206, %v253
  %v276 = vsub.f32 %v207, %v253
  %v277 = vsub.f32 %v208, %v253
  %v278 = vsub.f32 %v209, %v253
  %v279 = vsub.f32 %v210, %v253
  %v280 = vsub.f32 %v211, %v253
  %v281 = vsub.f32 %v212, %v253
  %v282 = vsub.f32 %v213, %v253
  %v283 = vsub.f32 %v214, %v253
  %v284 = vsub.f32 %v215, %v253
  %v285 = vsub.f32 %v216, %v253
  %v286 = vmul.f32 %v254, 1.442695
  %v287 = vpow.pop %v286
  %v288 = vmul.f32 %v255, 1.442695
  %v289 = vpow.pop %v288
  %v290 = vmul.f32 %v256, 1.442695
  %v291 = vpow.pop %v290
  %v292 = vmul.f32 %v257, 1.442695
  %v293 = vpow.pop %v292
  %v294 = vmul.f32 %v258, 1.442695
  %v295 = vpow.pop %v294
  %v296 = vmul.f32 %v259, 1.442695
  %v297 = vpow.pop %v296
  %v298 = vmul.f32 %v260, 1.442695
  %v299 = vpow.pop %v298
  %v300 = vmul.f32 %v261, 1.442695
  %v301 = vpow.pop %v300
  %v302 = vmul.f32 %v262, 1.442695
  %v303 = vpow.pop %v302
  %v304 = vmul.f32 %v263, 1.442695
  %v305 = vpow.pop %v304
  %v306 = vmul.f32 %v264, 1.442695
  %v307 = vpow.pop %v306
  %v308 = vmul.f32 %v265, 1.442695
  %v309 = vpow.pop %v308
  %v310 = vmul.f32 %v266, 1.442695
  %v311 = vpow.pop %v310
  %v312 = vmul.f32 %v267, 1.442695
  %v313 = vpow.pop %v312
  %v314 = vmul.f32 %v268, 1.442695
  %v315 = vpow.pop %v314
  %v316 = vmul.f32 %v269, 1.442695
  %v317 = vpow.pop %v316
  %v318 = vmul.f32 %v270, 1.442695
  %v319 = vpow.pop %v318
  %v320 = vmul.f32 %v271, 1.442695
  %v321 = vpow.pop %v320
  %v322 = vmul.f32 %v272, 1.442695
  %v323 = vpow.pop %v322
  %v324 = vmul.f32 %v273, 1.442695
  %v325 = vpow.pop %v324
  %v326 = vmul.f32 %v274, 1.442695
  %v327 = vpow.pop %v326
  %v328 = vmul.f32 %v275, 1.442695
  %v329 = vpow.pop %v328
  %v330 = vmul.f32 %v276, 1.442695
  %v331 = vpow.pop %v330
  %v332 = vmul.f32 %v277, 1.442695
  %v333 = vpow.pop %v332
  %v334 = vmul.f32 %v278, 1.442695
  %v335 = vpow.pop %v334
  %v336 = vmul.f32 %v279, 1.442695
  %v337 = vpow.pop %v336
  %v338 = vmul.f32 %v280, 1.442695
  %v339 = vpow.pop %v338
  %v340 = vmul.f32 %v281, 1.442695
  %v341 = vpow.pop %v340
  %v342 = vmul.f32 %v282, 1.442695
  %v343 = vpow.pop %v342
  %v344 = vmul.f32 %v283, 1.442695
  %v345 = vpow.pop %v344
  %v346 = vmul.f32 %v284, 1.442695
  %v347 = vpow.pop %v346
  %v348 = vmul.f32 %v285, 1.442695
  %v349 = vpow.pop %v348
  %v350 = vadd.f32 %v287, %v289
  %v351 = vadd.f32 %v350, %v291
  %v352 = vadd.f32 %v351, %v293
  %v353 = vadd.f32 %v352, %v295
  %v354 = vadd.f32 %v353, %v297
  %v355 = vadd.f32 %v354, %v299
  %v356 = vadd.f32 %v355, %v301
  %v357 = vadd.f32 %v356, %v303
  %v358 = vadd.f32 %v357, %v305
  %v359 = vadd.f32 %v358, %v307
  %v360 = vadd.f32 %v359, %v309
  %v361 = vadd.f32 %v360, %v311
  %v362 = vadd.f32 %v361, %v313
  %v363 = vadd.f32 %v362, %v315
  %v364 = vadd.f32 %v363, %v317
  %v365 = vadd.f32 %v364, %v319
  %v366 = vadd.f32 %v365, %v321
  %v367 = vadd.f32 %v366, %v323
  %v368 = vadd.f32 %v367, %v325
  %v369 = vadd.f32 %v368, %v327
  %v370 = vadd.f32 %v369, %v329
  %v371 = vadd.f32 %v370, %v331
  %v372 = vadd.f32 %v371, %v333
  %v373 = vadd.f32 %v372, %v335
  %v374 = vadd.f32 %v373, %v337
  %v375 = vadd.f32 %v374, %v339
  %v376 = vadd.f32 %v375, %v341
  %v377 = vadd.f32 %v376, %v343
  %v378 = vadd.f32 %v377, %v345
  %v379 = vadd.f32 %v378, %v347
  %v380 = vadd.f32 %v379, %v349
  %v381 = vrot.slane %v380, 4
  %v382 = vadd.f32 %v380, %v381
  %v383 = vrot.slane %v382, 2
  %v384 = vadd.f32 %v382, %v383
  %v385 = vrot.slane %v384, 1
  %v386 = vadd.f32 %v384, %v385
  %v387 = vrcp.pop %v386
  %v388 = vmul.f32 %v287, %v387
  %v389 = vmul.f32 %v289, %v387
  %v390 = vmul.f32 %v291, %v387
  %v391 = vmul.f32 %v293, %v387
  %v392 = vmul.f32 %v295, %v387
  %v393 = vmul.f32 %v297, %v387
  %v394 = vmul.f32 %v299, %v387
  %v395 = vmul.f32 %v301, %v387
  %v396 = vmul.f32 %v303, %v387
  %v397 = vmul.f32 %v305, %v387
  %v398 = vmul.f32 %v307, %v387
  %v399 = vmul.f32 %v309, %v387
  %v400 = vmul.f32 %v311, %v387
  %v401 = vmul.f32 %v313, %v387
  %v402 = vmul.f32 %v315, %v387
  %v403 = vmul.f32 %v317, %v387
  %v404 = vmul.f32 %v319, %v387
  %v405 = vmul.f32 %v321, %v387
  %v406 = vmul.f32 %v323, %v387
  %v407 = vmul.f32 %v325, %v387
  %v408 = vmul.f32 %v327, %v387
  %v409 = vmul.f32 %v329, %v387
  %v410 = vmul.f32 %v331, %v387
  %v411 = vmul.f32 %v333, %v387
  %v412 = vmul.f32 %v335, %v387
  %v413 = vmul.f32 %v337, %v387
  %v414 = vmul.f32 %v339, %v387
  %v415 = vmul.f32 %v341, %v387
  %v416 = vmul.f32 %v343, %v387
  %v417 = vmul.f32 %v345, %v387
  %v418 = vmul.f32 %v347, %v387
  %v419 = vmul.f32 %v349, %v387
  %s420 = scalar_lea.vmem %s0, 256
  %v421 = vld [vmem:[%s420] sm:$0xff]
  %v422 = vld [vmem:[%s420 + $0x8] sm:$0xff]
  %v423 = vld [vmem:[%s420 + $0x10] sm:$0xff]
  %v424 = vld [vmem:[%s420 + $0x18] sm:$0xff]
  %v425 = vld [vmem:[%s420 + $0x20] sm:$0xff]
  %v426 = vld [vmem:[%s420 + $0x28] sm:$0xff]
  %v427 = vld [vmem:[%s420 + $0x30] sm:$0xff]
  %v428 = vld [vmem:[%s420 + $0x38] sm:$0xff]
  %v429 = vld [vmem:[%s420 + $0x40] sm:$0xff]
  %v430 = vld [vmem:[%s420 + $0x48] sm:$0xff]
  %v431 = vld [vmem:[%s420 + $0x50] sm:$0xff]
  %v432 = vld [vmem:[%s420 + $0x58] sm:$0xff]
  %v433 = vld [vmem:[%s420 + $0x60] sm:$0xff]
  %v434 = vld [vmem:[%s420 + $0x68] sm:$0xff]
  %v435 = vld [vmem:[%s420 + $0x70] sm:$0xff]
  %v436 = vld [vmem:[%s420 + $0x78] sm:$0xff]
  %v437 = vld [vmem:[%s420 + $0x80] sm:$0xff]
  %v438 = vld [vmem:[%s420 + $0x88] sm:$0xff]
  %v439 = vld [vmem:[%s420 + $0x90] sm:$0xff]
  %v440 = vld [vmem:[%s420 + $0x98] sm:$0xff]
  %v441 = vld [vmem:[%s420 + $0xa0] sm:$0xff]
  %v442 = vld [vmem:[%s420 + $0xa8] sm:$0xff]
  %v443 = vld [vmem:[%s420 + $0xb0] sm:$0xff]
  %v444 = vld [vmem:[%s420 + $0xb8] sm:$0xff]
  %v445 = vld [vmem:[%s420 + $0xc0] sm:$0xff]
  %v446 = vld [vmem:[%s420 + $0xc8] sm:$0xff]
  %v447 = vld [vmem:[%s420 + $0xd0] sm:$0xff]
  %v448 = vld [vmem:[%s420 + $0xd8] sm:$0xff]
  %v449 = vld [vmem:[%s420 + $0xe0] sm:$0xff]
  %v450 = vld [vmem:[%s420 + $0xe8] sm:$0xff]
  %v451 = vld [vmem:[%s420 + $0xf0] sm:$0xff]
  %v452 = vld [vmem:[%s420 + $0xf8] sm:$0xff]
  %v453 = vmul.f32 %v421, %v53
  %v454 = vmul.f32 %v422, %v53
  %v455 = vmul.f32 %v423, %v53
  %v456 = vmul.f32 %v424, %v53
  %v457 = vmul.f32 %v425, %v53
  %v458 = vmul.f32 %v426, %v53
  %v459 = vmul.f32 %v427, %v53
  %v460 = vmul.f32 %v428, %v53
  %v461 = vmul.f32 %v429, %v53
  %v462 = vmul.f32 %v430, %v53
  %v463 = vmul.f32 %v431, %v53
  %v464 = vmul.f32 %v432, %v53
  %v465 = vmul.f32 %v433, %v53
  %v466 = vmul.f32 %v434, %v53
  %v467 = vmul.f32 %v435, %v53
  %v468 = vmul.f32 %v436, %v53
  %v469 = vmul.f32 %v437, %v53
  %v470 = vmul.f32 %v438, %v53
  %v471 = vmul.f32 %v439, %v53
  %v472 = vmul.f32 %v440, %v53
  %v473 = vmul.f32 %v441, %v53
  %v474 = vmul.f32 %v442, %v53
  %v475 = vmul.f32 %v443, %v53
  %v476 = vmul.f32 %v444, %v53
  %v477 = vmul.f32 %v445, %v53
  %v478 = vmul.f32 %v446, %v53
  %v479 = vmul.f32 %v447, %v53
  %v480 = vmul.f32 %v448, %v53
  %v481 = vmul.f32 %v449, %v53
  %v482 = vmul.f32 %v450, %v53
  %v483 = vmul.f32 %v451, %v53
  %v484 = vmul.f32 %v452, %v53
  %v485 = vsel %vm87, %v453, 0.0
  %486 = vadd.xlane.f32.xlu0 %v485
  %v487 = vpop.xlane.xlu0 %486
  %v488 = vsel %vm87, %v454, 0.0
  %489 = vadd.xlane.f32.xlu0 %v488
  %v490 = vpop.xlane.xlu0 %489
  %v491 = vsel %vm87, %v455, 0.0
  %492 = vadd.xlane.f32.xlu0 %v491
  %v493 = vpop.xlane.xlu0 %492
  %v494 = vsel %vm87, %v456, 0.0
  %495 = vadd.xlane.f32.xlu0 %v494
  %v496 = vpop.xlane.xlu0 %495
  %v497 = vsel %vm87, %v457, 0.0
  %498 = vadd.xlane.f32.xlu0 %v497
  %v499 = vpop.xlane.xlu0 %498
  %v500 = vsel %vm87, %v458, 0.0
  %501 = vadd.xlane.f32.xlu0 %v500
  %v502 = vpop.xlane.xlu0 %501
  %v503 = vsel %vm87, %v459, 0.0
  %504 = vadd.xlane.f32.xlu0 %v503
  %v505 = vpop.xlane.xlu0 %504
  %v506 = vsel %vm87, %v460, 0.0
  %507 = vadd.xlane.f32.xlu0 %v506
  %v508 = vpop.xlane.xlu0 %507
  %v509 = vsel %vm87, %v461, 0.0
  %510 = vadd.xlane.f32.xlu0 %v509
  %v511 = vpop.xlane.xlu0 %510
  %v512 = vsel %vm87, %v462, 0.0
  %513 = vadd.xlane.f32.xlu0 %v512
  %v514 = vpop.xlane.xlu0 %513
  %v515 = vsel %vm87, %v463, 0.0
  %516 = vadd.xlane.f32.xlu0 %v515
  %v517 = vpop.xlane.xlu0 %516
  %v518 = vsel %vm87, %v464, 0.0
  %519 = vadd.xlane.f32.xlu0 %v518
  %v520 = vpop.xlane.xlu0 %519
  %v521 = vsel %vm87, %v465, 0.0
  %522 = vadd.xlane.f32.xlu0 %v521
  %v523 = vpop.xlane.xlu0 %522
  %v524 = vsel %vm87, %v466, 0.0
  %525 = vadd.xlane.f32.xlu0 %v524
  %v526 = vpop.xlane.xlu0 %525
  %v527 = vsel %vm87, %v467, 0.0
  %528 = vadd.xlane.f32.xlu0 %v527
  %v529 = vpop.xlane.xlu0 %528
  %v530 = vsel %vm87, %v468, 0.0
  %531 = vadd.xlane.f32.xlu0 %v530
  %v532 = vpop.xlane.xlu0 %531
  %v533 = vsel %vm87, %v469, 0.0
  %534 = vadd.xlane.f32.xlu0 %v533
  %v535 = vpop.xlane.xlu0 %534
  %v536 = vsel %vm87, %v470, 0.0
  %537 = vadd.xlane.f32.xlu0 %v536
  %v538 = vpop.xlane.xlu0 %537
  %v539 = vsel %vm87, %v471, 0.0
  %540 = vadd.xlane.f32.xlu0 %v539
  %v541 = vpop.xlane.xlu0 %540
  %v542 = vsel %vm87, %v472, 0.0
  %543 = vadd.xlane.f32.xlu0 %v542
  %v544 = vpop.xlane.xlu0 %543
  %v545 = vsel %vm87, %v473, 0.0
  %546 = vadd.xlane.f32.xlu0 %v545
  %v547 = vpop.xlane.xlu0 %546
  %v548 = vsel %vm87, %v474, 0.0
  %549 = vadd.xlane.f32.xlu0 %v548
  %v550 = vpop.xlane.xlu0 %549
  %v551 = vsel %vm87, %v475, 0.0
  %552 = vadd.xlane.f32.xlu0 %v551
  %v553 = vpop.xlane.xlu0 %552
  %v554 = vsel %vm87, %v476, 0.0
  %555 = vadd.xlane.f32.xlu0 %v554
  %v556 = vpop.xlane.xlu0 %555
  %v557 = vsel %vm87, %v477, 0.0
  %558 = vadd.xlane.f32.xlu0 %v557
  %v559 = vpop.xlane.xlu0 %558
  %v560 = vsel %vm87, %v478, 0.0
  %561 = vadd.xlane.f32.xlu0 %v560
  %v562 = vpop.xlane.xlu0 %561
  %v563 = vsel %vm87, %v479, 0.0
  %564 = vadd.xlane.f32.xlu0 %v563
  %v565 = vpop.xlane.xlu0 %564
  %v566 = vsel %vm87, %v480, 0.0
  %567 = vadd.xlane.f32.xlu0 %v566
  %v568 = vpop.xlane.xlu0 %567
  %v569 = vsel %vm87, %v481, 0.0
  %570 = vadd.xlane.f32.xlu0 %v569
  %v571 = vpop.xlane.xlu0 %570
  %v572 = vsel %vm87, %v482, 0.0
  %573 = vadd.xlane.f32.xlu0 %v572
  %v574 = vpop.xlane.xlu0 %573
  %v575 = vsel %vm87, %v483, 0.0
  %576 = vadd.xlane.f32.xlu0 %v575
  %v577 = vpop.xlane.xlu0 %576
  %v578 = vsel %vm87, %v484, 0.0
  %579 = vadd.xlane.f32.xlu0 %v578
  %v580 = vpop.xlane.xlu0 %579
  %v581 = vadd.f32 %v487, %v184
  %v582 = vadd.f32 %v490, %v184
  %v583 = vadd.f32 %v493, %v184
  %v584 = vadd.f32 %v496, %v184
  %v585 = vadd.f32 %v499, %v184
  %v586 = vadd.f32 %v502, %v184
  %v587 = vadd.f32 %v505, %v184
  %v588 = vadd.f32 %v508, %v184
  %v589 = vadd.f32 %v511, %v184
  %v590 = vadd.f32 %v514, %v184
  %v591 = vadd.f32 %v517, %v184
  %v592 = vadd.f32 %v520, %v184
  %v593 = vadd.f32 %v523, %v184
  %v594 = vadd.f32 %v526, %v184
  %v595 = vadd.f32 %v529, %v184
  %v596 = vadd.f32 %v532, %v184
  %v597 = vadd.f32 %v535, %v184
  %v598 = vadd.f32 %v538, %v184
  %v599 = vadd.f32 %v541, %v184
  %v600 = vadd.f32 %v544, %v184
  %v601 = vadd.f32 %v547, %v184
  %v602 = vadd.f32 %v550, %v184
  %v603 = vadd.f32 %v553, %v184
  %v604 = vadd.f32 %v556, %v184
  %v605 = vadd.f32 %v559, %v184
  %v606 = vadd.f32 %v562, %v184
  %v607 = vadd.f32 %v565, %v184
  %v608 = vadd.f32 %v568, %v184
  %v609 = vadd.f32 %v571, %v184
  %v610 = vadd.f32 %v574, %v184
  %v611 = vadd.f32 %v577, %v184
  %v612 = vadd.f32 %v580, %v184
  %v613 = vmax.f32 %v581, %v585
  %v614 = vmax.f32 %v582, %v586
  %v615 = vmax.f32 %v583, %v587
  %v616 = vmax.f32 %v584, %v588
  %v617 = vmax.f32 %v613, %v589
  %v618 = vmax.f32 %v614, %v590
  %v619 = vmax.f32 %v615, %v591
  %v620 = vmax.f32 %v616, %v592
  %v621 = vmax.f32 %v617, %v593
  %v622 = vmax.f32 %v618, %v594
  %v623 = vmax.f32 %v619, %v595
  %v624 = vmax.f32 %v620, %v596
  %v625 = vmax.f32 %v621, %v597
  %v626 = vmax.f32 %v622, %v598
  %v627 = vmax.f32 %v623, %v599
  %v628 = vmax.f32 %v624, %v600
  %v629 = vmax.f32 %v625, %v601
  %v630 = vmax.f32 %v626, %v602
  %v631 = vmax.f32 %v627, %v603
  %v632 = vmax.f32 %v628, %v604
  %v633 = vmax.f32 %v629, %v605
  %v634 = vmax.f32 %v630, %v606
  %v635 = vmax.f32 %v631, %v607
  %v636 = vmax.f32 %v632, %v608
  %v637 = vmax.f32 %v633, %v609
  %v638 = vmax.f32 %v634, %v610
  %v639 = vmax.f32 %v635, %v611
  %v640 = vmax.f32 %v636, %v612
  %v641 = vmax.f32 %v637, %v638
  %v642 = vmax.f32 %v639, %v640
  %v643 = vmax.f32 %v641, %v642
  %v644 = vrot.slane %v643, 4
  %v645 = vmax.f32 %v643, %v644
  %v646 = vrot.slane %v645, 2
  %v647 = vmax.f32 %v645, %v646
  %v648 = vrot.slane %v647, 1
  %v649 = vmax.f32 %v647, %v648
  %v650 = vsub.f32 %v581, %v649
  %v651 = vsub.f32 %v582, %v649
  %v652 = vsub.f32 %v583, %v649
  %v653 = vsub.f32 %v584, %v649
  %v654 = vsub.f32 %v585, %v649
  %v655 = vsub.f32 %v586, %v649
  %v656 = vsub.f32 %v587, %v649
  %v657 = vsub.f32 %v588, %v649
  %v658 = vsub.f32 %v589, %v649
  %v659 = vsub.f32 %v590, %v649
  %v660 = vsub.f32 %v591, %v649
  %v661 = vsub.f32 %v592, %v649
  %v662 = vsub.f32 %v593, %v649
  %v663 = vsub.f32 %v594, %v649
  %v664 = vsub.f32 %v595, %v649
  %v665 = vsub.f32 %v596, %v649
  %v666 = vsub.f32 %v597, %v649
  %v667 = vsub.f32 %v598, %v649
  %v668 = vsub.f32 %v599, %v649
  %v669 = vsub.f32 %v600, %v649
  %v670 = vsub.f32 %v601, %v649
  %v671 = vsub.f32 %v602, %v649
  %v672 = vsub.f32 %v603, %v649
  %v673 = vsub.f32 %v604, %v649
  %v674 = vsub.f32 %v605, %v649
  %v675 = vsub.f32 %v606, %v649
  %v676 = vsub.f32 %v607, %v649
  %v677 = vsub.f32 %v608, %v649
  %v678 = vsub.f32 %v609, %v649
  %v679 = vsub.f32 %v610, %v649
  %v680 = vsub.f32 %v611, %v649
  %v681 = vsub.f32 %v612, %v649
  %v682 = vmul.f32 %v650, 1.442695
  %v683 = vpow.pop %v682
  %v684 = vmul.f32 %v651, 1.442695
  %v685 = vpow.pop %v684
  %v686 = vmul.f32 %v652, 1.442695
  %v687 = vpow.pop %v686
  %v688 = vmul.f32 %v653, 1.442695
  %v689 = vpow.pop %v688
  %v690 = vmul.f32 %v654, 1.442695
  %v691 = vpow.pop %v690
  %v692 = vmul.f32 %v655, 1.442695
  %v693 = vpow.pop %v692
  %v694 = vmul.f32 %v656, 1.442695
  %v695 = vpow.pop %v694
  %v696 = vmul.f32 %v657, 1.442695
  %v697 = vpow.pop %v696
  %v698 = vmul.f32 %v658, 1.442695
  %v699 = vpow.pop %v698
  %v700 = vmul.f32 %v659, 1.442695
  %v701 = vpow.pop %v700
  %v702 = vmul.f32 %v660, 1.442695
  %v703 = vpow.pop %v702
  %v704 = vmul.f32 %v661, 1.442695
  %v705 = vpow.pop %v704
  %v706 = vmul.f32 %v662, 1.442695
  %v707 = vpow.pop %v706
  %v708 = vmul.f32 %v663, 1.442695
  %v709 = vpow.pop %v708
  %v710 = vmul.f32 %v664, 1.442695
  %v711 = vpow.pop %v710
  %v712 = vmul.f32 %v665, 1.442695
  %v713 = vpow.pop %v712
  %v714 = vmul.f32 %v666, 1.442695
  %v715 = vpow.pop %v714
  %v716 = vmul.f32 %v667, 1.442695
  %v717 = vpow.pop %v716
  %v718 = vmul.f32 %v668, 1.442695
  %v719 = vpow.pop %v718
  %v720 = vmul.f32 %v669, 1.442695
  %v721 = vpow.pop %v720
  %v722 = vmul.f32 %v670, 1.442695
  %v723 = vpow.pop %v722
  %v724 = vmul.f32 %v671, 1.442695
  %v725 = vpow.pop %v724
  %v726 = vmul.f32 %v672, 1.442695
  %v727 = vpow.pop %v726
  %v728 = vmul.f32 %v673, 1.442695
  %v729 = vpow.pop %v728
  %v730 = vmul.f32 %v674, 1.442695
  %v731 = vpow.pop %v730
  %v732 = vmul.f32 %v675, 1.442695
  %v733 = vpow.pop %v732
  %v734 = vmul.f32 %v676, 1.442695
  %v735 = vpow.pop %v734
  %v736 = vmul.f32 %v677, 1.442695
  %v737 = vpow.pop %v736
  %v738 = vmul.f32 %v678, 1.442695
  %v739 = vpow.pop %v738
  %v740 = vmul.f32 %v679, 1.442695
  %v741 = vpow.pop %v740
  %v742 = vmul.f32 %v680, 1.442695
  %v743 = vpow.pop %v742
  %v744 = vmul.f32 %v681, 1.442695
  %v745 = vpow.pop %v744
  %v746 = vadd.f32 %v683, %v685
  %v747 = vadd.f32 %v746, %v687
  %v748 = vadd.f32 %v747, %v689
  %v749 = vadd.f32 %v748, %v691
  %v750 = vadd.f32 %v749, %v693
  %v751 = vadd.f32 %v750, %v695
  %v752 = vadd.f32 %v751, %v697
  %v753 = vadd.f32 %v752, %v699
  %v754 = vadd.f32 %v753, %v701
  %v755 = vadd.f32 %v754, %v703
  %v756 = vadd.f32 %v755, %v705
  %v757 = vadd.f32 %v756, %v707
  %v758 = vadd.f32 %v757, %v709
  %v759 = vadd.f32 %v758, %v711
  %v760 = vadd.f32 %v759, %v713
  %v761 = vadd.f32 %v760, %v715
  %v762 = vadd.f32 %v761, %v717
  %v763 = vadd.f32 %v762, %v719
  %v764 = vadd.f32 %v763, %v721
  %v765 = vadd.f32 %v764, %v723
  %v766 = vadd.f32 %v765, %v725
  %v767 = vadd.f32 %v766, %v727
  %v768 = vadd.f32 %v767, %v729
  %v769 = vadd.f32 %v768, %v731
  %v770 = vadd.f32 %v769, %v733
  %v771 = vadd.f32 %v770, %v735
  %v772 = vadd.f32 %v771, %v737
  %v773 = vadd.f32 %v772, %v739
  %v774 = vadd.f32 %v773, %v741
  %v775 = vadd.f32 %v774, %v743
  %v776 = vadd.f32 %v775, %v745
  %v777 = vrot.slane %v776, 4
  %v778 = vadd.f32 %v776, %v777
  %v779 = vrot.slane %v778, 2
  %v780 = vadd.f32 %v778, %v779
  %v781 = vrot.slane %v780, 1
  %v782 = vadd.f32 %v780, %v781
  %v783 = vrcp.pop %v782
  %v784 = vmul.f32 %v683, %v783
  %v785 = vmul.f32 %v685, %v783
  %v786 = vmul.f32 %v687, %v783
  %v787 = vmul.f32 %v689, %v783
  %v788 = vmul.f32 %v691, %v783
  %v789 = vmul.f32 %v693, %v783
  %v790 = vmul.f32 %v695, %v783
  %v791 = vmul.f32 %v697, %v783
  %v792 = vmul.f32 %v699, %v783
  %v793 = vmul.f32 %v701, %v783
  %v794 = vmul.f32 %v703, %v783
  %v795 = vmul.f32 %v705, %v783
  %v796 = vmul.f32 %v707, %v783
  %v797 = vmul.f32 %v709, %v783
  %v798 = vmul.f32 %v711, %v783
  %v799 = vmul.f32 %v713, %v783
  %v800 = vmul.f32 %v715, %v783
  %v801 = vmul.f32 %v717, %v783
  %v802 = vmul.f32 %v719, %v783
  %v803 = vmul.f32 %v721, %v783
  %v804 = vmul.f32 %v723, %v783
  %v805 = vmul.f32 %v725, %v783
  %v806 = vmul.f32 %v727, %v783
  %v807 = vmul.f32 %v729, %v783
  %v808 = vmul.f32 %v731, %v783
  %v809 = vmul.f32 %v733, %v783
  %v810 = vmul.f32 %v735, %v783
  %v811 = vmul.f32 %v737, %v783
  %v812 = vmul.f32 %v739, %v783
  %v813 = vmul.f32 %v741, %v783
  %v814 = vmul.f32 %v743, %v783
  %v815 = vmul.f32 %v745, %v783
  %s816 = scalar_lea.vmem %s0, 512
  %v817 = vld [vmem:[%s816] sm:$0xff]
  %v818 = vld [vmem:[%s816 + $0x8] sm:$0xff]
  %v819 = vld [vmem:[%s816 + $0x10] sm:$0xff]
  %v820 = vld [vmem:[%s816 + $0x18] sm:$0xff]
  %v821 = vld [vmem:[%s816 + $0x20] sm:$0xff]
  %v822 = vld [vmem:[%s816 + $0x28] sm:$0xff]
  %v823 = vld [vmem:[%s816 + $0x30] sm:$0xff]
  %v824 = vld [vmem:[%s816 + $0x38] sm:$0xff]
  %v825 = vld [vmem:[%s816 + $0x40] sm:$0xff]
  %v826 = vld [vmem:[%s816 + $0x48] sm:$0xff]
  %v827 = vld [vmem:[%s816 + $0x50] sm:$0xff]
  %v828 = vld [vmem:[%s816 + $0x58] sm:$0xff]
  %v829 = vld [vmem:[%s816 + $0x60] sm:$0xff]
  %v830 = vld [vmem:[%s816 + $0x68] sm:$0xff]
  %v831 = vld [vmem:[%s816 + $0x70] sm:$0xff]
  %v832 = vld [vmem:[%s816 + $0x78] sm:$0xff]
  %v833 = vld [vmem:[%s816 + $0x80] sm:$0xff]
  %v834 = vld [vmem:[%s816 + $0x88] sm:$0xff]
  %v835 = vld [vmem:[%s816 + $0x90] sm:$0xff]
  %v836 = vld [vmem:[%s816 + $0x98] sm:$0xff]
  %v837 = vld [vmem:[%s816 + $0xa0] sm:$0xff]
  %v838 = vld [vmem:[%s816 + $0xa8] sm:$0xff]
  %v839 = vld [vmem:[%s816 + $0xb0] sm:$0xff]
  %v840 = vld [vmem:[%s816 + $0xb8] sm:$0xff]
  %v841 = vld [vmem:[%s816 + $0xc0] sm:$0xff]
  %v842 = vld [vmem:[%s816 + $0xc8] sm:$0xff]
  %v843 = vld [vmem:[%s816 + $0xd0] sm:$0xff]
  %v844 = vld [vmem:[%s816 + $0xd8] sm:$0xff]
  %v845 = vld [vmem:[%s816 + $0xe0] sm:$0xff]
  %v846 = vld [vmem:[%s816 + $0xe8] sm:$0xff]
  %v847 = vld [vmem:[%s816 + $0xf0] sm:$0xff]
  %v848 = vld [vmem:[%s816 + $0xf8] sm:$0xff]
  %v849 = vmul.f32 %v817, %v53
  %v850 = vmul.f32 %v818, %v53
  %v851 = vmul.f32 %v819, %v53
  %v852 = vmul.f32 %v820, %v53
  %v853 = vmul.f32 %v821, %v53
  %v854 = vmul.f32 %v822, %v53
  %v855 = vmul.f32 %v823, %v53
  %v856 = vmul.f32 %v824, %v53
  %v857 = vmul.f32 %v825, %v53
  %v858 = vmul.f32 %v826, %v53
  %v859 = vmul.f32 %v827, %v53
  %v860 = vmul.f32 %v828, %v53
  %v861 = vmul.f32 %v829, %v53
  %v862 = vmul.f32 %v830, %v53
  %v863 = vmul.f32 %v831, %v53
  %v864 = vmul.f32 %v832, %v53
  %v865 = vmul.f32 %v833, %v53
  %v866 = vmul.f32 %v834, %v53
  %v867 = vmul.f32 %v835, %v53
  %v868 = vmul.f32 %v836, %v53
  %v869 = vmul.f32 %v837, %v53
  %v870 = vmul.f32 %v838, %v53
  %v871 = vmul.f32 %v839, %v53
  %v872 = vmul.f32 %v840, %v53
  %v873 = vmul.f32 %v841, %v53
  %v874 = vmul.f32 %v842, %v53
  %v875 = vmul.f32 %v843, %v53
  %v876 = vmul.f32 %v844, %v53
  %v877 = vmul.f32 %v845, %v53
  %v878 = vmul.f32 %v846, %v53
  %v879 = vmul.f32 %v847, %v53
  %v880 = vmul.f32 %v848, %v53
  %v881 = vsel %vm87, %v849, 0.0
  %882 = vadd.xlane.f32.xlu0 %v881
  %v883 = vpop.xlane.xlu0 %882
  %v884 = vsel %vm87, %v850, 0.0
  %885 = vadd.xlane.f32.xlu0 %v884
  %v886 = vpop.xlane.xlu0 %885
  %v887 = vsel %vm87, %v851, 0.0
  %888 = vadd.xlane.f32.xlu0 %v887
  %v889 = vpop.xlane.xlu0 %888
  %v890 = vsel %vm87, %v852, 0.0
  %891 = vadd.xlane.f32.xlu0 %v890
  %v892 = vpop.xlane.xlu0 %891
  %v893 = vsel %vm87, %v853, 0.0
  %894 = vadd.xlane.f32.xlu0 %v893
  %v895 = vpop.xlane.xlu0 %894
  %v896 = vsel %vm87, %v854, 0.0
  %897 = vadd.xlane.f32.xlu0 %v896
  %v898 = vpop.xlane.xlu0 %897
  %v899 = vsel %vm87, %v855, 0.0
  %900 = vadd.xlane.f32.xlu0 %v899
  %v901 = vpop.xlane.xlu0 %900
  %v902 = vsel %vm87, %v856, 0.0
  %903 = vadd.xlane.f32.xlu0 %v902
  %v904 = vpop.xlane.xlu0 %903
  %v905 = vsel %vm87, %v857, 0.0
  %906 = vadd.xlane.f32.xlu0 %v905
  %v907 = vpop.xlane.xlu0 %906
  %v908 = vsel %vm87, %v858, 0.0
  %909 = vadd.xlane.f32.xlu0 %v908
  %v910 = vpop.xlane.xlu0 %909
  %v911 = vsel %vm87, %v859, 0.0
  %912 = vadd.xlane.f32.xlu0 %v911
  %v913 = vpop.xlane.xlu0 %912
  %v914 = vsel %vm87, %v860, 0.0
  %915 = vadd.xlane.f32.xlu0 %v914
  %v916 = vpop.xlane.xlu0 %915
  %v917 = vsel %vm87, %v861, 0.0
  %918 = vadd.xlane.f32.xlu0 %v917
  %v919 = vpop.xlane.xlu0 %918
  %v920 = vsel %vm87, %v862, 0.0
  %921 = vadd.xlane.f32.xlu0 %v920
  %v922 = vpop.xlane.xlu0 %921
  %v923 = vsel %vm87, %v863, 0.0
  %924 = vadd.xlane.f32.xlu0 %v923
  %v925 = vpop.xlane.xlu0 %924
  %v926 = vsel %vm87, %v864, 0.0
  %927 = vadd.xlane.f32.xlu0 %v926
  %v928 = vpop.xlane.xlu0 %927
  %v929 = vsel %vm87, %v865, 0.0
  %930 = vadd.xlane.f32.xlu0 %v929
  %v931 = vpop.xlane.xlu0 %930
  %v932 = vsel %vm87, %v866, 0.0
  %933 = vadd.xlane.f32.xlu0 %v932
  %v934 = vpop.xlane.xlu0 %933
  %v935 = vsel %vm87, %v867, 0.0
  %936 = vadd.xlane.f32.xlu0 %v935
  %v937 = vpop.xlane.xlu0 %936
  %v938 = vsel %vm87, %v868, 0.0
  %939 = vadd.xlane.f32.xlu0 %v938
  %v940 = vpop.xlane.xlu0 %939
  %v941 = vsel %vm87, %v869, 0.0
  %942 = vadd.xlane.f32.xlu0 %v941
  %v943 = vpop.xlane.xlu0 %942
  %v944 = vsel %vm87, %v870, 0.0
  %945 = vadd.xlane.f32.xlu0 %v944
  %v946 = vpop.xlane.xlu0 %945
  %v947 = vsel %vm87, %v871, 0.0
  %948 = vadd.xlane.f32.xlu0 %v947
  %v949 = vpop.xlane.xlu0 %948
  %v950 = vsel %vm87, %v872, 0.0
  %951 = vadd.xlane.f32.xlu0 %v950
  %v952 = vpop.xlane.xlu0 %951
  %v953 = vsel %vm87, %v873, 0.0
  %954 = vadd.xlane.f32.xlu0 %v953
  %v955 = vpop.xlane.xlu0 %954
  %v956 = vsel %vm87, %v874, 0.0
  %957 = vadd.xlane.f32.xlu0 %v956
  %v958 = vpop.xlane.xlu0 %957
  %v959 = vsel %vm87, %v875, 0.0
  %960 = vadd.xlane.f32.xlu0 %v959
  %v961 = vpop.xlane.xlu0 %960
  %v962 = vsel %vm87, %v876, 0.0
  %963 = vadd.xlane.f32.xlu0 %v962
  %v964 = vpop.xlane.xlu0 %963
  %v965 = vsel %vm87, %v877, 0.0
  %966 = vadd.xlane.f32.xlu0 %v965
  %v967 = vpop.xlane.xlu0 %966
  %v968 = vsel %vm87, %v878, 0.0
  %969 = vadd.xlane.f32.xlu0 %v968
  %v970 = vpop.xlane.xlu0 %969
  %v971 = vsel %vm87, %v879, 0.0
  %972 = vadd.xlane.f32.xlu0 %v971
  %v973 = vpop.xlane.xlu0 %972
  %v974 = vsel %vm87, %v880, 0.0
  %975 = vadd.xlane.f32.xlu0 %v974
  %v976 = vpop.xlane.xlu0 %975
  %v977 = vadd.f32 %v883, %v184
  %v978 = vadd.f32 %v886, %v184
  %v979 = vadd.f32 %v889, %v184
  %v980 = vadd.f32 %v892, %v184
  %v981 = vadd.f32 %v895, %v184
  %v982 = vadd.f32 %v898, %v184
  %v983 = vadd.f32 %v901, %v184
  %v984 = vadd.f32 %v904, %v184
  %v985 = vadd.f32 %v907, %v184
  %v986 = vadd.f32 %v910, %v184
  %v987 = vadd.f32 %v913, %v184
  %v988 = vadd.f32 %v916, %v184
  %v989 = vadd.f32 %v919, %v184
  %v990 = vadd.f32 %v922, %v184
  %v991 = vadd.f32 %v925, %v184
  %v992 = vadd.f32 %v928, %v184
  %v993 = vadd.f32 %v931, %v184
  %v994 = vadd.f32 %v934, %v184
  %v995 = vadd.f32 %v937, %v184
  %v996 = vadd.f32 %v940, %v184
  %v997 = vadd.f32 %v943, %v184
  %v998 = vadd.f32 %v946, %v184
  %v999 = vadd.f32 %v949, %v184
  %v1000 = vadd.f32 %v952, %v184
  %v1001 = vadd.f32 %v955, %v184
  %v1002 = vadd.f32 %v958, %v184
  %v1003 = vadd.f32 %v961, %v184
  %v1004 = vadd.f32 %v964, %v184
  %v1005 = vadd.f32 %v967, %v184
  %v1006 = vadd.f32 %v970, %v184
  %v1007 = vadd.f32 %v973, %v184
  %v1008 = vadd.f32 %v976, %v184
  %v1009 = vmax.f32 %v977, %v981
  %v1010 = vmax.f32 %v978, %v982
  %v1011 = vmax.f32 %v979, %v983
  %v1012 = vmax.f32 %v980, %v984
  %v1013 = vmax.f32 %v1009, %v985
  %v1014 = vmax.f32 %v1010, %v986
  %v1015 = vmax.f32 %v1011, %v987
  %v1016 = vmax.f32 %v1012, %v988
  %v1017 = vmax.f32 %v1013, %v989
  %v1018 = vmax.f32 %v1014, %v990
  %v1019 = vmax.f32 %v1015, %v991
  %v1020 = vmax.f32 %v1016, %v992
  %v1021 = vmax.f32 %v1017, %v993
  %v1022 = vmax.f32 %v1018, %v994
  %v1023 = vmax.f32 %v1019, %v995
  %v1024 = vmax.f32 %v1020, %v996
  %v1025 = vmax.f32 %v1021, %v997
  %v1026 = vmax.f32 %v1022, %v998
  %v1027 = vmax.f32 %v1023, %v999
  %v1028 = vmax.f32 %v1024, %v1000
  %v1029 = vmax.f32 %v1025, %v1001
  %v1030 = vmax.f32 %v1026, %v1002
  %v1031 = vmax.f32 %v1027, %v1003
  %v1032 = vmax.f32 %v1028, %v1004
  %v1033 = vmax.f32 %v1029, %v1005
  %v1034 = vmax.f32 %v1030, %v1006
  %v1035 = vmax.f32 %v1031, %v1007
  %v1036 = vmax.f32 %v1032, %v1008
  %v1037 = vmax.f32 %v1033, %v1034
  %v1038 = vmax.f32 %v1035, %v1036
  %v1039 = vmax.f32 %v1037, %v1038
  %v1040 = vrot.slane %v1039, 4
  %v1041 = vmax.f32 %v1039, %v1040
  %v1042 = vrot.slane %v1041, 2
  %v1043 = vmax.f32 %v1041, %v1042
  %v1044 = vrot.slane %v1043, 1
  %v1045 = vmax.f32 %v1043, %v1044
  %v1046 = vsub.f32 %v977, %v1045
  %v1047 = vsub.f32 %v978, %v1045
  %v1048 = vsub.f32 %v979, %v1045
  %v1049 = vsub.f32 %v980, %v1045
  %v1050 = vsub.f32 %v981, %v1045
  %v1051 = vsub.f32 %v982, %v1045
  %v1052 = vsub.f32 %v983, %v1045
  %v1053 = vsub.f32 %v984, %v1045
  %v1054 = vsub.f32 %v985, %v1045
  %v1055 = vsub.f32 %v986, %v1045
  %v1056 = vsub.f32 %v987, %v1045
  %v1057 = vsub.f32 %v988, %v1045
  %v1058 = vsub.f32 %v989, %v1045
  %v1059 = vsub.f32 %v990, %v1045
  %v1060 = vsub.f32 %v991, %v1045
  %v1061 = vsub.f32 %v992, %v1045
  %v1062 = vsub.f32 %v993, %v1045
  %v1063 = vsub.f32 %v994, %v1045
  %v1064 = vsub.f32 %v995, %v1045
  %v1065 = vsub.f32 %v996, %v1045
  %v1066 = vsub.f32 %v997, %v1045
  %v1067 = vsub.f32 %v998, %v1045
  %v1068 = vsub.f32 %v999, %v1045
  %v1069 = vsub.f32 %v1000, %v1045
  %v1070 = vsub.f32 %v1001, %v1045
  %v1071 = vsub.f32 %v1002, %v1045
  %v1072 = vsub.f32 %v1003, %v1045
  %v1073 = vsub.f32 %v1004, %v1045
  %v1074 = vsub.f32 %v1005, %v1045
  %v1075 = vsub.f32 %v1006, %v1045
  %v1076 = vsub.f32 %v1007, %v1045
  %v1077 = vsub.f32 %v1008, %v1045
  %v1078 = vmul.f32 %v1046, 1.442695
  %v1079 = vpow.pop %v1078
  %v1080 = vmul.f32 %v1047, 1.442695
  %v1081 = vpow.pop %v1080
  %v1082 = vmul.f32 %v1048, 1.442695
  %v1083 = vpow.pop %v1082
  %v1084 = vmul.f32 %v1049, 1.442695
  %v1085 = vpow.pop %v1084
  %v1086 = vmul.f32 %v1050, 1.442695
  %v1087 = vpow.pop %v1086
  %v1088 = vmul.f32 %v1051, 1.442695
  %v1089 = vpow.pop %v1088
  %v1090 = vmul.f32 %v1052, 1.442695
  %v1091 = vpow.pop %v1090
  %v1092 = vmul.f32 %v1053, 1.442695
  %v1093 = vpow.pop %v1092
  %v1094 = vmul.f32 %v1054, 1.442695
  %v1095 = vpow.pop %v1094
  %v1096 = vmul.f32 %v1055, 1.442695
  %v1097 = vpow.pop %v1096
  %v1098 = vmul.f32 %v1056, 1.442695
  %v1099 = vpow.pop %v1098
  %v1100 = vmul.f32 %v1057, 1.442695
  %v1101 = vpow.pop %v1100
  %v1102 = vmul.f32 %v1058, 1.442695
  %v1103 = vpow.pop %v1102
  %v1104 = vmul.f32 %v1059, 1.442695
  %v1105 = vpow.pop %v1104
  %v1106 = vmul.f32 %v1060, 1.442695
  %v1107 = vpow.pop %v1106
  %v1108 = vmul.f32 %v1061, 1.442695
  %v1109 = vpow.pop %v1108
  %v1110 = vmul.f32 %v1062, 1.442695
  %v1111 = vpow.pop %v1110
  %v1112 = vmul.f32 %v1063, 1.442695
  %v1113 = vpow.pop %v1112
  %v1114 = vmul.f32 %v1064, 1.442695
  %v1115 = vpow.pop %v1114
  %v1116 = vmul.f32 %v1065, 1.442695
  %v1117 = vpow.pop %v1116
  %v1118 = vmul.f32 %v1066, 1.442695
  %v1119 = vpow.pop %v1118
  %v1120 = vmul.f32 %v1067, 1.442695
  %v1121 = vpow.pop %v1120
  %v1122 = vmul.f32 %v1068, 1.442695
  %v1123 = vpow.pop %v1122
  %v1124 = vmul.f32 %v1069, 1.442695
  %v1125 = vpow.pop %v1124
  %v1126 = vmul.f32 %v1070, 1.442695
  %v1127 = vpow.pop %v1126
  %v1128 = vmul.f32 %v1071, 1.442695
  %v1129 = vpow.pop %v1128
  %v1130 = vmul.f32 %v1072, 1.442695
  %v1131 = vpow.pop %v1130
  %v1132 = vmul.f32 %v1073, 1.442695
  %v1133 = vpow.pop %v1132
  %v1134 = vmul.f32 %v1074, 1.442695
  %v1135 = vpow.pop %v1134
  %v1136 = vmul.f32 %v1075, 1.442695
  %v1137 = vpow.pop %v1136
  %v1138 = vmul.f32 %v1076, 1.442695
  %v1139 = vpow.pop %v1138
  %v1140 = vmul.f32 %v1077, 1.442695
  %v1141 = vpow.pop %v1140
  %v1142 = vadd.f32 %v1079, %v1081
  %v1143 = vadd.f32 %v1142, %v1083
  %v1144 = vadd.f32 %v1143, %v1085
  %v1145 = vadd.f32 %v1144, %v1087
  %v1146 = vadd.f32 %v1145, %v1089
  %v1147 = vadd.f32 %v1146, %v1091
  %v1148 = vadd.f32 %v1147, %v1093
  %v1149 = vadd.f32 %v1148, %v1095
  %v1150 = vadd.f32 %v1149, %v1097
  %v1151 = vadd.f32 %v1150, %v1099
  %v1152 = vadd.f32 %v1151, %v1101
  %v1153 = vadd.f32 %v1152, %v1103
  %v1154 = vadd.f32 %v1153, %v1105
  %v1155 = vadd.f32 %v1154, %v1107
  %v1156 = vadd.f32 %v1155, %v1109
  %v1157 = vadd.f32 %v1156, %v1111
  %v1158 = vadd.f32 %v1157, %v1113
  %v1159 = vadd.f32 %v1158, %v1115
  %v1160 = vadd.f32 %v1159, %v1117
  %v1161 = vadd.f32 %v1160, %v1119
  %v1162 = vadd.f32 %v1161, %v1121
  %v1163 = vadd.f32 %v1162, %v1123
  %v1164 = vadd.f32 %v1163, %v1125
  %v1165 = vadd.f32 %v1164, %v1127
  %v1166 = vadd.f32 %v1165, %v1129
  %v1167 = vadd.f32 %v1166, %v1131
  %v1168 = vadd.f32 %v1167, %v1133
  %v1169 = vadd.f32 %v1168, %v1135
  %v1170 = vadd.f32 %v1169, %v1137
  %v1171 = vadd.f32 %v1170, %v1139
  %v1172 = vadd.f32 %v1171, %v1141
  %v1173 = vrot.slane %v1172, 4
  %v1174 = vadd.f32 %v1172, %v1173
  %v1175 = vrot.slane %v1174, 2
  %v1176 = vadd.f32 %v1174, %v1175
  %v1177 = vrot.slane %v1176, 1
  %v1178 = vadd.f32 %v1176, %v1177
  %v1179 = vrcp.pop %v1178
  %v1180 = vmul.f32 %v1079, %v1179
  %v1181 = vmul.f32 %v1081, %v1179
  %v1182 = vmul.f32 %v1083, %v1179
  %v1183 = vmul.f32 %v1085, %v1179
  %v1184 = vmul.f32 %v1087, %v1179
  %v1185 = vmul.f32 %v1089, %v1179
  %v1186 = vmul.f32 %v1091, %v1179
  %v1187 = vmul.f32 %v1093, %v1179
  %v1188 = vmul.f32 %v1095, %v1179
  %v1189 = vmul.f32 %v1097, %v1179
  %v1190 = vmul.f32 %v1099, %v1179
  %v1191 = vmul.f32 %v1101, %v1179
  %v1192 = vmul.f32 %v1103, %v1179
  %v1193 = vmul.f32 %v1105, %v1179
  %v1194 = vmul.f32 %v1107, %v1179
  %v1195 = vmul.f32 %v1109, %v1179
  %v1196 = vmul.f32 %v1111, %v1179
  %v1197 = vmul.f32 %v1113, %v1179
  %v1198 = vmul.f32 %v1115, %v1179
  %v1199 = vmul.f32 %v1117, %v1179
  %v1200 = vmul.f32 %v1119, %v1179
  %v1201 = vmul.f32 %v1121, %v1179
  %v1202 = vmul.f32 %v1123, %v1179
  %v1203 = vmul.f32 %v1125, %v1179
  %v1204 = vmul.f32 %v1127, %v1179
  %v1205 = vmul.f32 %v1129, %v1179
  %v1206 = vmul.f32 %v1131, %v1179
  %v1207 = vmul.f32 %v1133, %v1179
  %v1208 = vmul.f32 %v1135, %v1179
  %v1209 = vmul.f32 %v1137, %v1179
  %v1210 = vmul.f32 %v1139, %v1179
  %v1211 = vmul.f32 %v1141, %v1179
  %v1212 = vadd.f32 %v388, %v784
  %v1213 = vadd.f32 %v389, %v785
  %v1214 = vadd.f32 %v390, %v786
  %v1215 = vadd.f32 %v391, %v787
  %v1216 = vadd.f32 %v392, %v788
  %v1217 = vadd.f32 %v393, %v789
  %v1218 = vadd.f32 %v394, %v790
  %v1219 = vadd.f32 %v395, %v791
  %v1220 = vadd.f32 %v396, %v792
  %v1221 = vadd.f32 %v397, %v793
  %v1222 = vadd.f32 %v398, %v794
  %v1223 = vadd.f32 %v399, %v795
  %v1224 = vadd.f32 %v400, %v796
  %v1225 = vadd.f32 %v401, %v797
  %v1226 = vadd.f32 %v402, %v798
  %v1227 = vadd.f32 %v403, %v799
  %v1228 = vadd.f32 %v404, %v800
  %v1229 = vadd.f32 %v405, %v801
  %v1230 = vadd.f32 %v406, %v802
  %v1231 = vadd.f32 %v407, %v803
  %v1232 = vadd.f32 %v408, %v804
  %v1233 = vadd.f32 %v409, %v805
  %v1234 = vadd.f32 %v410, %v806
  %v1235 = vadd.f32 %v411, %v807
  %v1236 = vadd.f32 %v412, %v808
  %v1237 = vadd.f32 %v413, %v809
  %v1238 = vadd.f32 %v414, %v810
  %v1239 = vadd.f32 %v415, %v811
  %v1240 = vadd.f32 %v416, %v812
  %v1241 = vadd.f32 %v417, %v813
  %v1242 = vadd.f32 %v418, %v814
  %v1243 = vadd.f32 %v419, %v815
  %v1244 = vadd.f32 %v1212, %v1180
  %v1245 = vadd.f32 %v1213, %v1181
  %v1246 = vadd.f32 %v1214, %v1182
  %v1247 = vadd.f32 %v1215, %v1183
  %v1248 = vadd.f32 %v1216, %v1184
  %v1249 = vadd.f32 %v1217, %v1185
  %v1250 = vadd.f32 %v1218, %v1186
  %v1251 = vadd.f32 %v1219, %v1187
  %v1252 = vadd.f32 %v1220, %v1188
  %v1253 = vadd.f32 %v1221, %v1189
  %v1254 = vadd.f32 %v1222, %v1190
  %v1255 = vadd.f32 %v1223, %v1191
  %v1256 = vadd.f32 %v1224, %v1192
  %v1257 = vadd.f32 %v1225, %v1193
  %v1258 = vadd.f32 %v1226, %v1194
  %v1259 = vadd.f32 %v1227, %v1195
  %v1260 = vadd.f32 %v1228, %v1196
  %v1261 = vadd.f32 %v1229, %v1197
  %v1262 = vadd.f32 %v1230, %v1198
  %v1263 = vadd.f32 %v1231, %v1199
  %v1264 = vadd.f32 %v1232, %v1200
  %v1265 = vadd.f32 %v1233, %v1201
  %v1266 = vadd.f32 %v1234, %v1202
  %v1267 = vadd.f32 %v1235, %v1203
  %v1268 = vadd.f32 %v1236, %v1204
  %v1269 = vadd.f32 %v1237, %v1205
  %v1270 = vadd.f32 %v1238, %v1206
  %v1271 = vadd.f32 %v1239, %v1207
  %v1272 = vadd.f32 %v1240, %v1208
  %v1273 = vadd.f32 %v1241, %v1209
  %v1274 = vadd.f32 %v1242, %v1210
  %v1275 = vadd.f32 %v1243, %v1211
  %v1276 = vrcp.pop %v1244
  %v1277 = vmul.f32 1.0, %v1276
  %v1278 = vrcp.pop %v1245
  %v1279 = vmul.f32 1.0, %v1278
  %v1280 = vrcp.pop %v1246
  %v1281 = vmul.f32 1.0, %v1280
  %v1282 = vrcp.pop %v1247
  %v1283 = vmul.f32 1.0, %v1282
  %v1284 = vrcp.pop %v1248
  %v1285 = vmul.f32 1.0, %v1284
  %v1286 = vrcp.pop %v1249
  %v1287 = vmul.f32 1.0, %v1286
  %v1288 = vrcp.pop %v1250
  %v1289 = vmul.f32 1.0, %v1288
  %v1290 = vrcp.pop %v1251
  %v1291 = vmul.f32 1.0, %v1290
  %v1292 = vrcp.pop %v1252
  %v1293 = vmul.f32 1.0, %v1292
  %v1294 = vrcp.pop %v1253
  %v1295 = vmul.f32 1.0, %v1294
  %v1296 = vrcp.pop %v1254
  %v1297 = vmul.f32 1.0, %v1296
  %v1298 = vrcp.pop %v1255
  %v1299 = vmul.f32 1.0, %v1298
  %v1300 = vrcp.pop %v1256
  %v1301 = vmul.f32 1.0, %v1300
  %v1302 = vrcp.pop %v1257
  %v1303 = vmul.f32 1.0, %v1302
  %v1304 = vrcp.pop %v1258
  %v1305 = vmul.f32 1.0, %v1304
  %v1306 = vrcp.pop %v1259
  %v1307 = vmul.f32 1.0, %v1306
  %v1308 = vrcp.pop %v1260
  %v1309 = vmul.f32 1.0, %v1308
  %v1310 = vrcp.pop %v1261
  %v1311 = vmul.f32 1.0, %v1310
  %v1312 = vrcp.pop %v1262
  %v1313 = vmul.f32 1.0, %v1312
  %v1314 = vrcp.pop %v1263
  %v1315 = vmul.f32 1.0, %v1314
  %v1316 = vrcp.pop %v1264
  %v1317 = vmul.f32 1.0, %v1316
  %v1318 = vrcp.pop %v1265
  %v1319 = vmul.f32 1.0, %v1318
  %v1320 = vrcp.pop %v1266
  %v1321 = vmul.f32 1.0, %v1320
  %v1322 = vrcp.pop %v1267
  %v1323 = vmul.f32 1.0, %v1322
  %v1324 = vrcp.pop %v1268
  %v1325 = vmul.f32 1.0, %v1324
  %v1326 = vrcp.pop %v1269
  %v1327 = vmul.f32 1.0, %v1326
  %v1328 = vrcp.pop %v1270
  %v1329 = vmul.f32 1.0, %v1328
  %v1330 = vrcp.pop %v1271
  %v1331 = vmul.f32 1.0, %v1330
  %v1332 = vrcp.pop %v1272
  %v1333 = vmul.f32 1.0, %v1332
  %v1334 = vrcp.pop %v1273
  %v1335 = vmul.f32 1.0, %v1334
  %v1336 = vrcp.pop %v1274
  %v1337 = vmul.f32 1.0, %v1336
  %v1338 = vrcp.pop %v1275
  %v1339 = vmul.f32 1.0, %v1338
  %v1340 = vmul.f32 %v388, %v1277
  %v1341 = vmul.f32 %v389, %v1279
  %v1342 = vmul.f32 %v390, %v1281
  %v1343 = vmul.f32 %v391, %v1283
  %v1344 = vmul.f32 %v392, %v1285
  %v1345 = vmul.f32 %v393, %v1287
  %v1346 = vmul.f32 %v394, %v1289
  %v1347 = vmul.f32 %v395, %v1291
  %v1348 = vmul.f32 %v396, %v1293
  %v1349 = vmul.f32 %v397, %v1295
  %v1350 = vmul.f32 %v398, %v1297
  %v1351 = vmul.f32 %v399, %v1299
  %v1352 = vmul.f32 %v400, %v1301
  %v1353 = vmul.f32 %v401, %v1303
  %v1354 = vmul.f32 %v402, %v1305
  %v1355 = vmul.f32 %v403, %v1307
  %v1356 = vmul.f32 %v404, %v1309
  %v1357 = vmul.f32 %v405, %v1311
  %v1358 = vmul.f32 %v406, %v1313
  %v1359 = vmul.f32 %v407, %v1315
  %v1360 = vmul.f32 %v408, %v1317
  %v1361 = vmul.f32 %v409, %v1319
  %v1362 = vmul.f32 %v410, %v1321
  %v1363 = vmul.f32 %v411, %v1323
  %v1364 = vmul.f32 %v412, %v1325
  %v1365 = vmul.f32 %v413, %v1327
  %v1366 = vmul.f32 %v414, %v1329
  %v1367 = vmul.f32 %v415, %v1331
  %v1368 = vmul.f32 %v416, %v1333
  %v1369 = vmul.f32 %v417, %v1335
  %v1370 = vmul.f32 %v418, %v1337
  %v1371 = vmul.f32 %v419, %v1339
  %v1372 = vmul.f32 %v1340, %v17
  %v1373 = vmul.f32 %v1341, %v18
  %v1374 = vmul.f32 %v1342, %v19
  %v1375 = vmul.f32 %v1343, %v20
  %v1376 = vmul.f32 %v1344, %v21
  %v1377 = vmul.f32 %v1345, %v22
  %v1378 = vmul.f32 %v1346, %v23
  %v1379 = vmul.f32 %v1347, %v24
  %v1380 = vmul.f32 %v1348, %v25
  %v1381 = vmul.f32 %v1349, %v26
  %v1382 = vmul.f32 %v1350, %v27
  %v1383 = vmul.f32 %v1351, %v28
  %v1384 = vmul.f32 %v1352, %v29
  %v1385 = vmul.f32 %v1353, %v30
  %v1386 = vmul.f32 %v1354, %v31
  %v1387 = vmul.f32 %v1355, %v32
  %v1388 = vmul.f32 %v1356, %v33
  %v1389 = vmul.f32 %v1357, %v34
  %v1390 = vmul.f32 %v1358, %v35
  %v1391 = vmul.f32 %v1359, %v36
  %v1392 = vmul.f32 %v1360, %v37
  %v1393 = vmul.f32 %v1361, %v38
  %v1394 = vmul.f32 %v1362, %v39
  %v1395 = vmul.f32 %v1363, %v40
  %v1396 = vmul.f32 %v1364, %v41
  %v1397 = vmul.f32 %v1365, %v42
  %v1398 = vmul.f32 %v1366, %v43
  %v1399 = vmul.f32 %v1367, %v44
  %v1400 = vmul.f32 %v1368, %v45
  %v1401 = vmul.f32 %v1369, %v46
  %v1402 = vmul.f32 %v1370, %v47
  %v1403 = vmul.f32 %v1371, %v48
  %v1404 = vmul.f32 %v784, %v1277
  %v1405 = vmul.f32 %v785, %v1279
  %v1406 = vmul.f32 %v786, %v1281
  %v1407 = vmul.f32 %v787, %v1283
  %v1408 = vmul.f32 %v788, %v1285
  %v1409 = vmul.f32 %v789, %v1287
  %v1410 = vmul.f32 %v790, %v1289
  %v1411 = vmul.f32 %v791, %v1291
  %v1412 = vmul.f32 %v792, %v1293
  %v1413 = vmul.f32 %v793, %v1295
  %v1414 = vmul.f32 %v794, %v1297
  %v1415 = vmul.f32 %v795, %v1299
  %v1416 = vmul.f32 %v796, %v1301
  %v1417 = vmul.f32 %v797, %v1303
  %v1418 = vmul.f32 %v798, %v1305
  %v1419 = vmul.f32 %v799, %v1307
  %v1420 = vmul.f32 %v800, %v1309
  %v1421 = vmul.f32 %v801, %v1311
  %v1422 = vmul.f32 %v802, %v1313
  %v1423 = vmul.f32 %v803, %v1315
  %v1424 = vmul.f32 %v804, %v1317
  %v1425 = vmul.f32 %v805, %v1319
  %v1426 = vmul.f32 %v806, %v1321
  %v1427 = vmul.f32 %v807, %v1323
  %v1428 = vmul.f32 %v808, %v1325
  %v1429 = vmul.f32 %v809, %v1327
  %v1430 = vmul.f32 %v810, %v1329
  %v1431 = vmul.f32 %v811, %v1331
  %v1432 = vmul.f32 %v812, %v1333
  %v1433 = vmul.f32 %v813, %v1335
  %v1434 = vmul.f32 %v814, %v1337
  %v1435 = vmul.f32 %v815, %v1339
  %v1436 = vmul.f32 %v1404, %v421
  %v1437 = vmul.f32 %v1405, %v422
  %v1438 = vmul.f32 %v1406, %v423
  %v1439 = vmul.f32 %v1407, %v424
  %v1440 = vmul.f32 %v1408, %v425
  %v1441 = vmul.f32 %v1409, %v426
  %v1442 = vmul.f32 %v1410, %v427
  %v1443 = vmul.f32 %v1411, %v428
  %v1444 = vmul.f32 %v1412, %v429
  %v1445 = vmul.f32 %v1413, %v430
  %v1446 = vmul.f32 %v1414, %v431
  %v1447 = vmul.f32 %v1415, %v432
  %v1448 = vmul.f32 %v1416, %v433
  %v1449 = vmul.f32 %v1417, %v434
  %v1450 = vmul.f32 %v1418, %v435
  %v1451 = vmul.f32 %v1419, %v436
  %v1452 = vmul.f32 %v1420, %v437
  %v1453 = vmul.f32 %v1421, %v438
  %v1454 = vmul.f32 %v1422, %v439
  %v1455 = vmul.f32 %v1423, %v440
  %v1456 = vmul.f32 %v1424, %v441
  %v1457 = vmul.f32 %v1425, %v442
  %v1458 = vmul.f32 %v1426, %v443
  %v1459 = vmul.f32 %v1427, %v444
  %v1460 = vmul.f32 %v1428, %v445
  %v1461 = vmul.f32 %v1429, %v446
  %v1462 = vmul.f32 %v1430, %v447
  %v1463 = vmul.f32 %v1431, %v448
  %v1464 = vmul.f32 %v1432, %v449
  %v1465 = vmul.f32 %v1433, %v450
  %v1466 = vmul.f32 %v1434, %v451
  %v1467 = vmul.f32 %v1435, %v452
  %v1468 = vadd.f32 %v1372, %v1436
  %v1469 = vadd.f32 %v1373, %v1437
  %v1470 = vadd.f32 %v1374, %v1438
  %v1471 = vadd.f32 %v1375, %v1439
  %v1472 = vadd.f32 %v1376, %v1440
  %v1473 = vadd.f32 %v1377, %v1441
  %v1474 = vadd.f32 %v1378, %v1442
  %v1475 = vadd.f32 %v1379, %v1443
  %v1476 = vadd.f32 %v1380, %v1444
  %v1477 = vadd.f32 %v1381, %v1445
  %v1478 = vadd.f32 %v1382, %v1446
  %v1479 = vadd.f32 %v1383, %v1447
  %v1480 = vadd.f32 %v1384, %v1448
  %v1481 = vadd.f32 %v1385, %v1449
  %v1482 = vadd.f32 %v1386, %v1450
  %v1483 = vadd.f32 %v1387, %v1451
  %v1484 = vadd.f32 %v1388, %v1452
  %v1485 = vadd.f32 %v1389, %v1453
  %v1486 = vadd.f32 %v1390, %v1454
  %v1487 = vadd.f32 %v1391, %v1455
  %v1488 = vadd.f32 %v1392, %v1456
  %v1489 = vadd.f32 %v1393, %v1457
  %v1490 = vadd.f32 %v1394, %v1458
  %v1491 = vadd.f32 %v1395, %v1459
  %v1492 = vadd.f32 %v1396, %v1460
  %v1493 = vadd.f32 %v1397, %v1461
  %v1494 = vadd.f32 %v1398, %v1462
  %v1495 = vadd.f32 %v1399, %v1463
  %v1496 = vadd.f32 %v1400, %v1464
  %v1497 = vadd.f32 %v1401, %v1465
  %v1498 = vadd.f32 %v1402, %v1466
  %v1499 = vadd.f32 %v1403, %v1467
  %v1500 = vmul.f32 %v1180, %v1277
  %v1501 = vmul.f32 %v1181, %v1279
  %v1502 = vmul.f32 %v1182, %v1281
  %v1503 = vmul.f32 %v1183, %v1283
  %v1504 = vmul.f32 %v1184, %v1285
  %v1505 = vmul.f32 %v1185, %v1287
  %v1506 = vmul.f32 %v1186, %v1289
  %v1507 = vmul.f32 %v1187, %v1291
  %v1508 = vmul.f32 %v1188, %v1293
  %v1509 = vmul.f32 %v1189, %v1295
  %v1510 = vmul.f32 %v1190, %v1297
  %v1511 = vmul.f32 %v1191, %v1299
  %v1512 = vmul.f32 %v1192, %v1301
  %v1513 = vmul.f32 %v1193, %v1303
  %v1514 = vmul.f32 %v1194, %v1305
  %v1515 = vmul.f32 %v1195, %v1307
  %v1516 = vmul.f32 %v1196, %v1309
  %v1517 = vmul.f32 %v1197, %v1311
  %v1518 = vmul.f32 %v1198, %v1313
  %v1519 = vmul.f32 %v1199, %v1315
  %v1520 = vmul.f32 %v1200, %v1317
  %v1521 = vmul.f32 %v1201, %v1319
  %v1522 = vmul.f32 %v1202, %v1321
  %v1523 = vmul.f32 %v1203, %v1323
  %v1524 = vmul.f32 %v1204, %v1325
  %v1525 = vmul.f32 %v1205, %v1327
  %v1526 = vmul.f32 %v1206, %v1329
  %v1527 = vmul.f32 %v1207, %v1331
  %v1528 = vmul.f32 %v1208, %v1333
  %v1529 = vmul.f32 %v1209, %v1335
  %v1530 = vmul.f32 %v1210, %v1337
  %v1531 = vmul.f32 %v1211, %v1339
  %v1532 = vmul.f32 %v1500, %v817
  %v1533 = vmul.f32 %v1501, %v818
  %v1534 = vmul.f32 %v1502, %v819
  %v1535 = vmul.f32 %v1503, %v820
  %v1536 = vmul.f32 %v1504, %v821
  %v1537 = vmul.f32 %v1505, %v822
  %v1538 = vmul.f32 %v1506, %v823
  %v1539 = vmul.f32 %v1507, %v824
  %v1540 = vmul.f32 %v1508, %v825
  %v1541 = vmul.f32 %v1509, %v826
  %v1542 = vmul.f32 %v1510, %v827
  %v1543 = vmul.f32 %v1511, %v828
  %v1544 = vmul.f32 %v1512, %v829
  %v1545 = vmul.f32 %v1513, %v830
  %v1546 = vmul.f32 %v1514, %v831
  %v1547 = vmul.f32 %v1515, %v832
  %v1548 = vmul.f32 %v1516, %v833
  %v1549 = vmul.f32 %v1517, %v834
  %v1550 = vmul.f32 %v1518, %v835
  %v1551 = vmul.f32 %v1519, %v836
  %v1552 = vmul.f32 %v1520, %v837
  %v1553 = vmul.f32 %v1521, %v838
  %v1554 = vmul.f32 %v1522, %v839
  %v1555 = vmul.f32 %v1523, %v840
  %v1556 = vmul.f32 %v1524, %v841
  %v1557 = vmul.f32 %v1525, %v842
  %v1558 = vmul.f32 %v1526, %v843
  %v1559 = vmul.f32 %v1527, %v844
  %v1560 = vmul.f32 %v1528, %v845
  %v1561 = vmul.f32 %v1529, %v846
  %v1562 = vmul.f32 %v1530, %v847
  %v1563 = vmul.f32 %v1531, %v848
  %v1564 = vadd.f32 %v1468, %v1532
  %v1565 = vadd.f32 %v1469, %v1533
  %v1566 = vadd.f32 %v1470, %v1534
  %v1567 = vadd.f32 %v1471, %v1535
  %v1568 = vadd.f32 %v1472, %v1536
  %v1569 = vadd.f32 %v1473, %v1537
  %v1570 = vadd.f32 %v1474, %v1538
  %v1571 = vadd.f32 %v1475, %v1539
  %v1572 = vadd.f32 %v1476, %v1540
  %v1573 = vadd.f32 %v1477, %v1541
  %v1574 = vadd.f32 %v1478, %v1542
  %v1575 = vadd.f32 %v1479, %v1543
  %v1576 = vadd.f32 %v1480, %v1544
  %v1577 = vadd.f32 %v1481, %v1545
  %v1578 = vadd.f32 %v1482, %v1546
  %v1579 = vadd.f32 %v1483, %v1547
  %v1580 = vadd.f32 %v1484, %v1548
  %v1581 = vadd.f32 %v1485, %v1549
  %v1582 = vadd.f32 %v1486, %v1550
  %v1583 = vadd.f32 %v1487, %v1551
  %v1584 = vadd.f32 %v1488, %v1552
  %v1585 = vadd.f32 %v1489, %v1553
  %v1586 = vadd.f32 %v1490, %v1554
  %v1587 = vadd.f32 %v1491, %v1555
  %v1588 = vadd.f32 %v1492, %v1556
  %v1589 = vadd.f32 %v1493, %v1557
  %v1590 = vadd.f32 %v1494, %v1558
  %v1591 = vadd.f32 %v1495, %v1559
  %v1592 = vadd.f32 %v1496, %v1560
  %v1593 = vadd.f32 %v1497, %v1561
  %v1594 = vadd.f32 %v1498, %v1562
  %v1595 = vadd.f32 %v1499, %v1563
  %1596 = vst.msk [vmem:[%s3] sm:$0xff] %vm87, %v1564
  %1597 = vst.msk [vmem:[%s3 + $0x8] sm:$0xff] %vm87, %v1565
  %1598 = vst.msk [vmem:[%s3 + $0x10] sm:$0xff] %vm87, %v1566
  %1599 = vst.msk [vmem:[%s3 + $0x18] sm:$0xff] %vm87, %v1567
  %1600 = vst.msk [vmem:[%s3 + $0x20] sm:$0xff] %vm87, %v1568
  %1601 = vst.msk [vmem:[%s3 + $0x28] sm:$0xff] %vm87, %v1569
  %1602 = vst.msk [vmem:[%s3 + $0x30] sm:$0xff] %vm87, %v1570
  %1603 = vst.msk [vmem:[%s3 + $0x38] sm:$0xff] %vm87, %v1571
  %1604 = vst.msk [vmem:[%s3 + $0x40] sm:$0xff] %vm87, %v1572
  %1605 = vst.msk [vmem:[%s3 + $0x48] sm:$0xff] %vm87, %v1573
  %1606 = vst.msk [vmem:[%s3 + $0x50] sm:$0xff] %vm87, %v1574
  %1607 = vst.msk [vmem:[%s3 + $0x58] sm:$0xff] %vm87, %v1575
  %1608 = vst.msk [vmem:[%s3 + $0x60] sm:$0xff] %vm87, %v1576
  %1609 = vst.msk [vmem:[%s3 + $0x68] sm:$0xff] %vm87, %v1577
  %1610 = vst.msk [vmem:[%s3 + $0x70] sm:$0xff] %vm87, %v1578
  %1611 = vst.msk [vmem:[%s3 + $0x78] sm:$0xff] %vm87, %v1579
  %1612 = vst.msk [vmem:[%s3 + $0x80] sm:$0xff] %vm87, %v1580
  %1613 = vst.msk [vmem:[%s3 + $0x88] sm:$0xff] %vm87, %v1581
  %1614 = vst.msk [vmem:[%s3 + $0x90] sm:$0xff] %vm87, %v1582
  %1615 = vst.msk [vmem:[%s3 + $0x98] sm:$0xff] %vm87, %v1583
  %1616 = vst.msk [vmem:[%s3 + $0xa0] sm:$0xff] %vm87, %v1584
  %1617 = vst.msk [vmem:[%s3 + $0xa8] sm:$0xff] %vm87, %v1585
  %1618 = vst.msk [vmem:[%s3 + $0xb0] sm:$0xff] %vm87, %v1586
  %1619 = vst.msk [vmem:[%s3 + $0xb8] sm:$0xff] %vm87, %v1587
  %1620 = vst.msk [vmem:[%s3 + $0xc0] sm:$0xff] %vm87, %v1588
  %1621 = vst.msk [vmem:[%s3 + $0xc8] sm:$0xff] %vm87, %v1589
  %1622 = vst.msk [vmem:[%s3 + $0xd0] sm:$0xff] %vm87, %v1590
  %1623 = vst.msk [vmem:[%s3 + $0xd8] sm:$0xff] %vm87, %v1591
  %1624 = vst.msk [vmem:[%s3 + $0xe0] sm:$0xff] %vm87, %v1592
  %1625 = vst.msk [vmem:[%s3 + $0xe8] sm:$0xff] %vm87, %v1593
  %1626 = vst.msk [vmem:[%s3 + $0xf0] sm:$0xff] %vm87, %v1594
  %1627 = vst.msk [vmem:[%s3 + $0xf8] sm:$0xff] %vm87, %v1595
  // Predicated region
  $region14: #{tpu_custom_call.1} parent=0 // pred_check
    _
  $region15: #{tpu_custom_call.1} parent=0 // pred_check_branch
    %1629 = sbr.rel (0) target = $region17
  $region16: #{tpu_custom_call.1} parent=0 // pred_region
    _
  $region17: #{tpu_custom_call.1} parent=0 // pred_fallthru
    _
  // Predicated region
  $region18: #{tpu_custom_call.1} parent=0 // pred_check
    _
  $region19: #{tpu_custom_call.1} parent=0 // pred_check_branch
    %1631 = sbr.rel (0) target = $region21
  $region20: #{tpu_custom_call.1} parent=0 // pred_region
    _
  $region21: #{tpu_custom_call.1} parent=0 // pred_fallthru
    _

</llo_original>
